<compile_context>
chip_gen: v5e
topology: v5e:2x2
jax: 0.10.0
libtpu: 0.0.40
codegen_flags: <defaults>
</compile_context>

<pallas_src>
import math

import jax
import jax.numpy as jnp
from jax import lax
from jax.experimental import pallas as pl
from jax.experimental.pallas import tpu as pltpu


def _round_up(x, m):
    return (x + m - 1) // m * m


_MAX_SEQ_CHUNK = 64     # time steps of x (and gx scratch) resident per grid step
_MAX_BATCH_BLOCK = 256  # rows of h / x per batch-parallel grid block


def _make_gru_chunk_kernel(seq_len, s_chunk, hp, unroll, need_mask):
    """Build the per-(batch-block, seq-chunk) kernel body.

    Refs:
      x_ref : (s_chunk, B_BLK, I)      time-major x slice for this chunk
      w_i   : (I, 3*HP)                packed, gate-slot-padded input weights
      b_i   : (1, 3*HP)
      w_h   : (HP, 3*HP)               packed recurrent weights
      b_h   : (1, 3*HP)
      h_ref : (B_BLK, HP)              output block; resident across the chunk
                                       ("arbitrary") axis -> doubles as the carry
      gx_scr: (s_chunk, B_BLK, 3*HP)   VMEM scratch for this chunk's projection
    """

    def kernel(x_ref, w_i_ref, b_i_ref, w_h_ref, b_h_ref, h_ref, gx_scr):
        chunk = pl.program_id(1)

        @pl.when(chunk == 0)
        def _():
            h_ref[...] = jnp.zeros_like(h_ref)

        b_blk = x_ref.shape[1]
        g = 3 * hp

        # Chunk-wide input projection: one wide MXU matmul, off the serial
        # h-chain (overlaps the next chunk's DMA / previous chunk's epilogue).
        x_chunk = x_ref[...].reshape(s_chunk * b_blk, x_ref.shape[2])
        gx = jnp.dot(x_chunk, w_i_ref[...],
                     preferred_element_type=jnp.float32) + b_i_ref[...]
        gx_scr[...] = gx.reshape(s_chunk, b_blk, g)

        # Weights stay in vregs/VMEM across the whole chunk.
        w_h = w_h_ref[...]
        b_h = b_h_ref[...]

        def step(t, h_prev):
            # All three recurrent gate projections in one MXU push: (B_BLK, 3*HP).
            gh = jnp.dot(h_prev, w_h, preferred_element_type=jnp.float32) + b_h
            gx_t = gx_scr[t]                                     # (B_BLK, 3*HP)
            # Fused r|z sigmoid: one EUP issue for both gates; tile-aligned slices.
            rz = jax.nn.sigmoid(gx_t[:, :2 * hp] + gh[:, :2 * hp])
            r = rz[:, :hp]
            z = rz[:, hp:]
            n = jnp.tanh(gx_t[:, 2 * hp:] + r * gh[:, 2 * hp:])
            h_new = (1.0 - z) * n + z * h_prev
            if need_mask:
                # Padded (beyond seq_len) time steps must not update h.
                t_global = chunk * s_chunk + t
                h_new = jnp.where(t_global < seq_len, h_new, h_prev)
            return h_new

        h_ref[...] = lax.fori_loop(0, s_chunk, step, h_ref[...], unroll=unroll)

    return kernel


def gru_mapping_forward(x, w_ih, w_hh, b_ih, b_hh):
    """Pallas implementation of GRUMapping.forward.

    Args:
      x:    (batch, seq, input_size) float32
      w_ih: (3*hidden, input_size)   PyTorch weight_ih_l0 (gate rows r, z, n)
      w_hh: (3*hidden, hidden)       PyTorch weight_hh_l0
      b_ih: (3*hidden,)              PyTorch bias_ih_l0
      b_hh: (3*hidden,)              PyTorch bias_hh_l0

    Returns:
      final hidden state, shape (1, batch, hidden)   (matches PyTorch return)
    """
    B, S, I = x.shape
    H = w_hh.shape[1]
    f32 = jnp.float32

    # Lane-tile aligned per-gate slot width and sublane-aligned batch.
    HP = _round_up(H, 128)
    G = 3 * HP
    B_BLK = min(_round_up(B, 8), _MAX_BATCH_BLOCK)
    BP = _round_up(_round_up(B, 8), B_BLK)

    S_CHUNK = min(S, _MAX_SEQ_CHUNK)
    S_PAD = _round_up(S, S_CHUNK)
    num_chunks = S_PAD // S_CHUNK
    num_b_blocks = BP // B_BLK

    x = x.astype(f32)
    w_ih = w_ih.astype(f32)
    w_hh = w_hh.astype(f32)
    b_ih = b_ih.astype(f32)
    b_hh = b_hh.astype(f32)

    # Pack weights/biases into gate-slot-aligned layout: slot k (r,z,n) occupies
    # columns [k*HP, k*HP + H); everything else is zero (inert in the GRU update).
    def pack_cols(w_t, rows):
        out = jnp.zeros((rows, G), f32)
        for k in range(3):
            out = out.at[: w_t.shape[0], k * HP:k * HP + H].set(
                w_t[:, k * H:(k + 1) * H])
        return out

    w_i_p = pack_cols(w_ih.T, I)                       # (I, 3*HP)
    w_h_p = pack_cols(w_hh.T, HP)                      # (HP, 3*HP)
    b_i_p = pack_cols(b_ih.reshape(1, 3 * H), 1)       # (1, 3*HP)
    b_h_p = pack_cols(b_hh.reshape(1, 3 * H), 1)       # (1, 3*HP)

    # Time-major, padded x: (S_PAD, BP, I).  Padded rows/steps are zeros.
    x_tm = jnp.transpose(x, (1, 0, 2))
    x_p = jnp.zeros((S_PAD, BP, I), f32).at[:S, :B, :].set(x_tm)

    # Explicit VMEM budget: 2x double-buffered inputs/output + scratch + headroom.
    bytes_f32 = 4
    x_chunk_b = S_CHUNK * B_BLK * I * bytes_f32
    gx_scr_b = S_CHUNK * B_BLK * G * bytes_f32
    w_b = (I * G + HP * G + 2 * G) * bytes_f32
    h_b = B_BLK * HP * bytes_f32
    vmem_needed = 2 * (x_chunk_b + w_b + h_b) + gx_scr_b
    vmem_limit = int(min(100 * 2 ** 20, max(2 * vmem_needed, 32 * 2 ** 20)))

    unroll = int(min(S_CHUNK, 8))
    need_mask = (S_PAD != S)
    kernel = _make_gru_chunk_kernel(S, S_CHUNK, HP, unroll, need_mask)

    h_pad = pl.pallas_call(
        kernel,
        out_shape=jax.ShapeDtypeStruct((BP, HP), f32),
        grid_spec=pltpu.PrefetchScalarGridSpec(
            num_scalar_prefetch=0,
            grid=(num_b_blocks, num_chunks),
            in_specs=[
                pl.BlockSpec((S_CHUNK, B_BLK, I), lambda b, c: (c, b, 0)),  # x chunk
                pl.BlockSpec((I, G), lambda b, c: (0, 0)),                  # W_i
                pl.BlockSpec((1, G), lambda b, c: (0, 0)),                  # b_i
                pl.BlockSpec((HP, G), lambda b, c: (0, 0)),                 # W_h
                pl.BlockSpec((1, G), lambda b, c: (0, 0)),                  # b_h
            ],
            out_specs=pl.BlockSpec((B_BLK, HP), lambda b, c: (b, 0)),       # h carry
            scratch_shapes=[pltpu.VMEM((S_CHUNK, B_BLK, G), f32)],
        ),
        compiler_params=pltpu.CompilerParams(
            dimension_semantics=("parallel", "arbitrary"),
            vmem_limit_bytes=vmem_limit,
        ),
    )(x_p, w_i_p, b_i_p, w_h_p, b_h_p)

    return h_pad[:B, :H][None, :, :]   # (1, B, H)


def _gru_reference(x, w_ih, w_hh, b_ih, b_hh):
    """Pure-JAX reference matching torch.nn.GRU (batch_first, h0 = 0)."""
    B, S, I = x.shape
    H = w_hh.shape[1]
    w_ir, w_iz, w_in = w_ih[0:H], w_ih[H:2 * H], w_ih[2 * H:3 * H]
    w_hr, w_hz, w_hn = w_hh[0:H], w_hh[H:2 * H], w_hh[2 * H:3 * H]
    b_ir, b_iz, b_in = b_ih[0:H], b_ih[H:2 * H], b_ih[2 * H:3 * H]
    b_hr, b_hz, b_hn = b_hh[0:H], b_hh[H:2 * H], b_hh[2 * H:3 * H]

    def step(h, x_t):
        r = jax.nn.sigmoid(x_t @ w_ir.T + b_ir + h @ w_hr.T + b_hr)
        z = jax.nn.sigmoid(x_t @ w_iz.T + b_iz + h @ w_hz.T + b_hz)
        n = jnp.tanh(x_t @ w_in.T + b_in + r * (h @ w_hn.T + b_hn))
        h = (1.0 - z) * n + z * h
        return h, None

    h0 = jnp.zeros((B, H), jnp.float32)
    h_final, _ = lax.scan(step, h0, jnp.transpose(x, (1, 0, 2)))
    return h_final[None, :, :]


if __name__ == "__main__":
    # Small shapes consistent with the module: batch=2, seq=8, input=16, hidden=32.
    batch_size, seq_len, input_size, hidden_size = 2, 8, 16, 32

    key = jax.random.PRNGKey(0)
    k_x, k_wih, k_whh, k_bih, k_bhh = jax.random.split(key, 5)

    # Deterministic PyTorch-style init: U(-1/sqrt(H), 1/sqrt(H)).
    bound = 1.0 / math.sqrt(hidden_size)
    x = jax.random.normal(k_x, (batch_size, seq_len, input_size), jnp.float32)
    w_ih = jax.random.uniform(k_wih, (3 * hidden_size, input_size), jnp.float32,
                              -bound, bound)
    w_hh = jax.random.uniform(k_whh, (3 * hidden_size, hidden_size), jnp.float32,
                              -bound, bound)
    b_ih = jax.random.uniform(k_bih, (3 * hidden_size,), jnp.float32, -bound, bound)
    b_hh = jax.random.uniform(k_bhh, (3 * hidden_size,), jnp.float32, -bound, bound)

    h_kernel = gru_mapping_forward(x, w_ih, w_hh, b_ih, b_hh)
    jax.block_until_ready(h_kernel)

    h_ref = _gru_reference(x, w_ih, w_hh, b_ih, b_hh)
    assert h_kernel.shape == (1, batch_size, hidden_size)
    assert jnp.allclose(h_kernel, h_ref, atol=1e-5, rtol=1e-5), "mismatch vs reference"

    print("KERNEL_OK")
</pallas_src>

<mosaic_0001>
module attributes {stable_mosaic.version = 11 : i64} {
  func.func @kernel(%arg0: i32, %arg1: i32, %arg2: memref<8x8x16xf32, #tpu.memory_space<vmem>>, %arg3: memref<16x384xf32, #tpu.memory_space<vmem>>, %arg4: memref<1x384xf32, #tpu.memory_space<vmem>>, %arg5: memref<128x384xf32, #tpu.memory_space<vmem>>, %arg6: memref<1x384xf32, #tpu.memory_space<vmem>>, %arg7: memref<8x128xf32, #tpu.memory_space<vmem>>, %arg8: memref<8x8x384xf32, #tpu.memory_space<vmem>>) attributes {dimension_semantics = [#tpu.dimension_semantics<parallel>, #tpu.dimension_semantics<arbitrary>], iteration_bounds = array<i64: 1, 1>, scalar_prefetch = 0 : i64, scratch_operands = 1 : i64, tpu.core_type = #tpu.core_type<tc>, window_params = [{transform_indices = @transform_0, window_bounds = array<i64: 8, 8, 16>}, {pipeline_mode = #tpu.pipeline_mode<synchronous>, transform_indices = @transform_1, window_bounds = array<i64: 16, 384>}, {pipeline_mode = #tpu.pipeline_mode<synchronous>, transform_indices = @transform_2, window_bounds = array<i64: 1, 384>}, {pipeline_mode = #tpu.pipeline_mode<synchronous>, transform_indices = @transform_3, window_bounds = array<i64: 128, 384>}, {pipeline_mode = #tpu.pipeline_mode<synchronous>, transform_indices = @transform_4, window_bounds = array<i64: 1, 384>}, {transform_indices = @transform_5, window_bounds = array<i64: 8, 128>}]} {
    %c0_i32 = arith.constant 0 : i32
    %0 = arith.cmpi eq, %arg1, %c0_i32 : i32
    %1 = arith.extui %0 : i1 to i32
    %c0_i32_0 = arith.constant 0 : i32
    %2 = arith.cmpi ne, %1, %c0_i32_0 : i32
    scf.if %2 {
      %cst_59 = arith.constant 0.000000e+00 : f32
      %224 = vector.broadcast %cst_59 : f32 to vector<8x128xf32>
      %c0_60 = arith.constant 0 : index
      %c0_61 = arith.constant 0 : index
      %225 = vector.load %arg7[%c0_60, %c0_61] : memref<8x128xf32, #tpu.memory_space<vmem>>, vector<8x128xf32>
      tpu.vector_store %arg7[%c0_60, %c0_61], %224 {strides = array<i32>} : memref<8x128xf32, #tpu.memory_space<vmem>>, vector<8x128xf32>,
    } else {
    }
    %c0 = arith.constant 0 : index
    %c0_1 = arith.constant 0 : index
    %c0_2 = arith.constant 0 : index
    %3 = vector.load %arg2[%c0, %c0_1, %c0_2] : memref<8x8x16xf32, #tpu.memory_space<vmem>>, vector<8x8x16xf32>
    %4 = vector.shape_cast %3 : vector<8x8x16xf32> to vector<64x16xf32>
    %c0_3 = arith.constant 0 : index
    %c0_4 = arith.constant 0 : index
    %5 = vector.load %arg3[%c0_3, %c0_4] : memref<16x384xf32, #tpu.memory_space<vmem>>, vector<16x384xf32>
    %cst = arith.constant dense<0.000000e+00> : vector<64x384xf32>
    %6 = tpu.matmul %4, %5, %cst {dimension_numbers = #tpu.dot_dimension_numbers<[1], [0], [0], [1], [0, 0, 1, 1], [], []>} : vector<64x16xf32>, vector<16x384xf32>, vector<64x384xf32> -> vector<64x384xf32>
    %c0_5 = arith.constant 0 : index
    %c0_6 = arith.constant 0 : index
    %7 = vector.load %arg4[%c0_5, %c0_6] : memref<1x384xf32, #tpu.memory_space<vmem>>, vector<1x384xf32>
    %8 = vector.broadcast %7 : vector<1x384xf32> to vector<64x384xf32>
    %9 = arith.addf %6, %8 : vector<64x384xf32>
    %10 = vector.shape_cast %9 : vector<64x384xf32> to vector<8x8x384xf32>
    %c0_7 = arith.constant 0 : index
    %c0_8 = arith.constant 0 : index
    %c0_9 = arith.constant 0 : index
    %11 = vector.load %arg8[%c0_7, %c0_8, %c0_9] : memref<8x8x384xf32, #tpu.memory_space<vmem>>, vector<8x8x384xf32>
    tpu.vector_store %arg8[%c0_7, %c0_8, %c0_9], %10 {strides = array<i32>} : memref<8x8x384xf32, #tpu.memory_space<vmem>>, vector<8x8x384xf32>,
    %c0_10 = arith.constant 0 : index
    %c0_11 = arith.constant 0 : index
    %12 = vector.load %arg5[%c0_10, %c0_11] : memref<128x384xf32, #tpu.memory_space<vmem>>, vector<128x384xf32>
    %c0_12 = arith.constant 0 : index
    %c0_13 = arith.constant 0 : index
    %13 = vector.load %arg6[%c0_12, %c0_13] : memref<1x384xf32, #tpu.memory_space<vmem>>, vector<1x384xf32>
    %c0_14 = arith.constant 0 : index
    %c0_15 = arith.constant 0 : index
    %14 = vector.load %arg7[%c0_14, %c0_15] : memref<8x128xf32, #tpu.memory_space<vmem>>, vector<8x128xf32>
    %c0_i32_16 = arith.constant 0 : i32
    %cst_17 = arith.constant dense<0.000000e+00> : vector<8x384xf32>
    %15 = tpu.matmul %14, %12, %cst_17 {dimension_numbers = #tpu.dot_dimension_numbers<[1], [0], [0], [1], [0, 0, 1, 1], [], []>} : vector<8x128xf32>, vector<128x384xf32>, vector<8x384xf32> -> vector<8x384xf32>
    %16 = vector.broadcast %13 : vector<1x384xf32> to vector<8x384xf32>
    %17 = arith.addf %15, %16 : vector<8x384xf32>
    %18 = arith.index_cast %c0_i32_16 : i32 to index
    %c0_18 = arith.constant 0 : index
    %c0_19 = arith.constant 0 : index
    %19 = vector.load %arg8[%18, %c0_18, %c0_19] : memref<8x8x384xf32, #tpu.memory_space<vmem>>, vector<1x8x384xf32>
    %20 = vector.shape_cast %19 : vector<1x8x384xf32> to vector<8x384xf32>
    %21 = vector.extract_strided_slice %20 {offsets = [0, 0], sizes = [8, 256], strides = [1, 1]} : vector<8x384xf32> to vector<8x256xf32>
    %22 = vector.extract_strided_slice %17 {offsets = [0, 0], sizes = [8, 256], strides = [1, 1]} : vector<8x384xf32> to vector<8x256xf32>
    %23 = arith.addf %21, %22 : vector<8x256xf32>
    %24 = arith.negf %23 : vector<8x256xf32>
    %25 = math.exp %24 : vector<8x256xf32>
    %cst_20 = arith.constant 1.000000e+00 : f32
    %26 = vector.broadcast %cst_20 : f32 to vector<8x256xf32>
    %27 = arith.addf %26, %25 : vector<8x256xf32>
    %28 = arith.divf %26, %27 : vector<8x256xf32>
    %29 = vector.extract_strided_slice %28 {offsets = [0, 0], sizes = [8, 128], strides = [1, 1]} : vector<8x256xf32> to vector<8x128xf32>
    %30 = vector.extract_strided_slice %28 {offsets = [0, 128], sizes = [8, 128], strides = [1, 1]} : vector<8x256xf32> to vector<8x128xf32>
    %31 = vector.extract_strided_slice %20 {offsets = [0, 256], sizes = [8, 128], strides = [1, 1]} : vector<8x384xf32> to vector<8x128xf32>
    %32 = vector.extract_strided_slice %17 {offsets = [0, 256], sizes = [8, 128], strides = [1, 1]} : vector<8x384xf32> to vector<8x128xf32>
    %33 = arith.mulf %29, %32 : vector<8x128xf32>
    %34 = arith.addf %31, %33 : vector<8x128xf32>
    %35 = math.tanh %34 : vector<8x128xf32>
    %cst_21 = arith.constant 1.000000e+00 : f32
    %36 = vector.broadcast %cst_21 : f32 to vector<8x128xf32>
    %37 = arith.subf %36, %30 : vector<8x128xf32>
    %38 = arith.mulf %37, %35 : vector<8x128xf32>
    %39 = arith.mulf %30, %14 : vector<8x128xf32>
    %40 = arith.addf %38, %39 : vector<8x128xf32>
    %c1_i32 = arith.constant 1 : i32
    %cst_22 = arith.constant dense<0.000000e+00> : vector<8x384xf32>
    %41 = tpu.matmul %40, %12, %cst_22 {dimension_numbers = #tpu.dot_dimension_numbers<[1], [0], [0], [1], [0, 0, 1, 1], [], []>} : vector<8x128xf32>, vector<128x384xf32>, vector<8x384xf32> -> vector<8x384xf32>
    %42 = vector.broadcast %13 : vector<1x384xf32> to vector<8x384xf32>
    %43 = arith.addf %41, %42 : vector<8x384xf32>
    %44 = arith.index_cast %c1_i32 : i32 to index
    %c0_23 = arith.constant 0 : index
    %c0_24 = arith.constant 0 : index
    %45 = vector.load %arg8[%44, %c0_23, %c0_24] : memref<8x8x384xf32, #tpu.memory_space<vmem>>, vector<1x8x384xf32>
    %46 = vector.shape_cast %45 : vector<1x8x384xf32> to vector<8x384xf32>
    %47 = vector.extract_strided_slice %46 {offsets = [0, 0], sizes = [8, 256], strides = [1, 1]} : vector<8x384xf32> to vector<8x256xf32>
    %48 = vector.extract_strided_slice %43 {offsets = [0, 0], sizes = [8, 256], strides = [1, 1]} : vector<8x384xf32> to vector<8x256xf32>
    %49 = arith.addf %47, %48 : vector<8x256xf32>
    %50 = arith.negf %49 : vector<8x256xf32>
    %51 = math.exp %50 : vector<8x256xf32>
    %cst_25 = arith.constant 1.000000e+00 : f32
    %52 = vector.broadcast %cst_25 : f32 to vector<8x256xf32>
    %53 = arith.addf %52, %51 : vector<8x256xf32>
    %54 = arith.divf %52, %53 : vector<8x256xf32>
    %55 = vector.extract_strided_slice %54 {offsets = [0, 0], sizes = [8, 128], strides = [1, 1]} : vector<8x256xf32> to vector<8x128xf32>
    %56 = vector.extract_strided_slice %54 {offsets = [0, 128], sizes = [8, 128], strides = [1, 1]} : vector<8x256xf32> to vector<8x128xf32>
    %57 = vector.extract_strided_slice %46 {offsets = [0, 256], sizes = [8, 128], strides = [1, 1]} : vector<8x384xf32> to vector<8x128xf32>
    %58 = vector.extract_strided_slice %43 {offsets = [0, 256], sizes = [8, 128], strides = [1, 1]} : vector<8x384xf32> to vector<8x128xf32>
    %59 = arith.mulf %55, %58 : vector<8x128xf32>
    %60 = arith.addf %57, %59 : vector<8x128xf32>
    %61 = math.tanh %60 : vector<8x128xf32>
    %cst_26 = arith.constant 1.000000e+00 : f32
    %62 = vector.broadcast %cst_26 : f32 to vector<8x128xf32>
    %63 = arith.subf %62, %56 : vector<8x128xf32>
    %64 = arith.mulf %63, %61 : vector<8x128xf32>
    %65 = arith.mulf %56, %40 : vector<8x128xf32>
    %66 = arith.addf %64, %65 : vector<8x128xf32>
    %c2_i32 = arith.constant 2 : i32
    %cst_27 = arith.constant dense<0.000000e+00> : vector<8x384xf32>
    %67 = tpu.matmul %66, %12, %cst_27 {dimension_numbers = #tpu.dot_dimension_numbers<[1], [0], [0], [1], [0, 0, 1, 1], [], []>} : vector<8x128xf32>, vector<128x384xf32>, vector<8x384xf32> -> vector<8x384xf32>
    %68 = vector.broadcast %13 : vector<1x384xf32> to vector<8x384xf32>
    %69 = arith.addf %67, %68 : vector<8x384xf32>
    %70 = arith.index_cast %c2_i32 : i32 to index
    %c0_28 = arith.constant 0 : index
    %c0_29 = arith.constant 0 : index
    %71 = vector.load %arg8[%70, %c0_28, %c0_29] : memref<8x8x384xf32, #tpu.memory_space<vmem>>, vector<1x8x384xf32>
    %72 = vector.shape_cast %71 : vector<1x8x384xf32> to vector<8x384xf32>
    %73 = vector.extract_strided_slice %72 {offsets = [0, 0], sizes = [8, 256], strides = [1, 1]} : vector<8x384xf32> to vector<8x256xf32>
    %74 = vector.extract_strided_slice %69 {offsets = [0, 0], sizes = [8, 256], strides = [1, 1]} : vector<8x384xf32> to vector<8x256xf32>
    %75 = arith.addf %73, %74 : vector<8x256xf32>
    %76 = arith.negf %75 : vector<8x256xf32>
    %77 = math.exp %76 : vector<8x256xf32>
    %cst_30 = arith.constant 1.000000e+00 : f32
    %78 = vector.broadcast %cst_30 : f32 to vector<8x256xf32>
    %79 = arith.addf %78, %77 : vector<8x256xf32>
    %80 = arith.divf %78, %79 : vector<8x256xf32>
    %81 = vector.extract_strided_slice %80 {offsets = [0, 0], sizes = [8, 128], strides = [1, 1]} : vector<8x256xf32> to vector<8x128xf32>
    %82 = vector.extract_strided_slice %80 {offsets = [0, 128], sizes = [8, 128], strides = [1, 1]} : vector<8x256xf32> to vector<8x128xf32>
    %83 = vector.extract_strided_slice %72 {offsets = [0, 256], sizes = [8, 128], strides = [1, 1]} : vector<8x384xf32> to vector<8x128xf32>
    %84 = vector.extract_strided_slice %69 {offsets = [0, 256], sizes = [8, 128], strides = [1, 1]} : vector<8x384xf32> to vector<8x128xf32>
    %85 = arith.mulf %81, %84 : vector<8x128xf32>
    %86 = arith.addf %83, %85 : vector<8x128xf32>
    %87 = math.tanh %86 : vector<8x128xf32>
    %cst_31 = arith.constant 1.000000e+00 : f32
    %88 = vector.broadcast %cst_31 : f32 to vector<8x128xf32>
    %89 = arith.subf %88, %82 : vector<8x128xf32>
    %90 = arith.mulf %89, %87 : vector<8x128xf32>
    %91 = arith.mulf %82, %66 : vector<8x128xf32>
    %92 = arith.addf %90, %91 : vector<8x128xf32>
    %c3_i32 = arith.constant 3 : i32
    %cst_32 = arith.constant dense<0.000000e+00> : vector<8x384xf32>
    %93 = tpu.matmul %92, %12, %cst_32 {dimension_numbers = #tpu.dot_dimension_numbers<[1], [0], [0], [1], [0, 0, 1, 1], [], []>} : vector<8x128xf32>, vector<128x384xf32>, vector<8x384xf32> -> vector<8x384xf32>
    %94 = vector.broadcast %13 : vector<1x384xf32> to vector<8x384xf32>
    %95 = arith.addf %93, %94 : vector<8x384xf32>
    %96 = arith.index_cast %c3_i32 : i32 to index
    %c0_33 = arith.constant 0 : index
    %c0_34 = arith.constant 0 : index
    %97 = vector.load %arg8[%96, %c0_33, %c0_34] : memref<8x8x384xf32, #tpu.memory_space<vmem>>, vector<1x8x384xf32>
    %98 = vector.shape_cast %97 : vector<1x8x384xf32> to vector<8x384xf32>
    %99 = vector.extract_strided_slice %98 {offsets = [0, 0], sizes = [8, 256], strides = [1, 1]} : vector<8x384xf32> to vector<8x256xf32>
    %100 = vector.extract_strided_slice %95 {offsets = [0, 0], sizes = [8, 256], strides = [1, 1]} : vector<8x384xf32> to vector<8x256xf32>
    %101 = arith.addf %99, %100 : vector<8x256xf32>
    %102 = arith.negf %101 : vector<8x256xf32>
    %103 = math.exp %102 : vector<8x256xf32>
    %cst_35 = arith.constant 1.000000e+00 : f32
    %104 = vector.broadcast %cst_35 : f32 to vector<8x256xf32>
    %105 = arith.addf %104, %103 : vector<8x256xf32>
    %106 = arith.divf %104, %105 : vector<8x256xf32>
    %107 = vector.extract_strided_slice %106 {offsets = [0, 0], sizes = [8, 128], strides = [1, 1]} : vector<8x256xf32> to vector<8x128xf32>
    %108 = vector.extract_strided_slice %106 {offsets = [0, 128], sizes = [8, 128], strides = [1, 1]} : vector<8x256xf32> to vector<8x128xf32>
    %109 = vector.extract_strided_slice %98 {offsets = [0, 256], sizes = [8, 128], strides = [1, 1]} : vector<8x384xf32> to vector<8x128xf32>
    %110 = vector.extract_strided_slice %95 {offsets = [0, 256], sizes = [8, 128], strides = [1, 1]} : vector<8x384xf32> to vector<8x128xf32>
    %111 = arith.mulf %107, %110 : vector<8x128xf32>
    %112 = arith.addf %109, %111 : vector<8x128xf32>
    %113 = math.tanh %112 : vector<8x128xf32>
    %cst_36 = arith.constant 1.000000e+00 : f32
    %114 = vector.broadcast %cst_36 : f32 to vector<8x128xf32>
    %115 = arith.subf %114, %108 : vector<8x128xf32>
    %116 = arith.mulf %115, %113 : vector<8x128xf32>
    %117 = arith.mulf %108, %92 : vector<8x128xf32>
    %118 = arith.addf %116, %117 : vector<8x128xf32>
    %c4_i32 = arith.constant 4 : i32
    %cst_37 = arith.constant dense<0.000000e+00> : vector<8x384xf32>
    %119 = tpu.matmul %118, %12, %cst_37 {dimension_numbers = #tpu.dot_dimension_numbers<[1], [0], [0], [1], [0, 0, 1, 1], [], []>} : vector<8x128xf32>, vector<128x384xf32>, vector<8x384xf32> -> vector<8x384xf32>
    %120 = vector.broadcast %13 : vector<1x384xf32> to vector<8x384xf32>
    %121 = arith.addf %119, %120 : vector<8x384xf32>
    %122 = arith.index_cast %c4_i32 : i32 to index
    %c0_38 = arith.constant 0 : index
    %c0_39 = arith.constant 0 : index
    %123 = vector.load %arg8[%122, %c0_38, %c0_39] : memref<8x8x384xf32, #tpu.memory_space<vmem>>, vector<1x8x384xf32>
    %124 = vector.shape_cast %123 : vector<1x8x384xf32> to vector<8x384xf32>
    %125 = vector.extract_strided_slice %124 {offsets = [0, 0], sizes = [8, 256], strides = [1, 1]} : vector<8x384xf32> to vector<8x256xf32>
    %126 = vector.extract_strided_slice %121 {offsets = [0, 0], sizes = [8, 256], strides = [1, 1]} : vector<8x384xf32> to vector<8x256xf32>
    %127 = arith.addf %125, %126 : vector<8x256xf32>
    %128 = arith.negf %127 : vector<8x256xf32>
    %129 = math.exp %128 : vector<8x256xf32>
    %cst_40 = arith.constant 1.000000e+00 : f32
    %130 = vector.broadcast %cst_40 : f32 to vector<8x256xf32>
    %131 = arith.addf %130, %129 : vector<8x256xf32>
    %132 = arith.divf %130, %131 : vector<8x256xf32>
    %133 = vector.extract_strided_slice %132 {offsets = [0, 0], sizes = [8, 128], strides = [1, 1]} : vector<8x256xf32> to vector<8x128xf32>
    %134 = vector.extract_strided_slice %132 {offsets = [0, 128], sizes = [8, 128], strides = [1, 1]} : vector<8x256xf32> to vector<8x128xf32>
    %135 = vector.extract_strided_slice %124 {offsets = [0, 256], sizes = [8, 128], strides = [1, 1]} : vector<8x384xf32> to vector<8x128xf32>
    %136 = vector.extract_strided_slice %121 {offsets = [0, 256], sizes = [8, 128], strides = [1, 1]} : vector<8x384xf32> to vector<8x128xf32>
    %137 = arith.mulf %133, %136 : vector<8x128xf32>
    %138 = arith.addf %135, %137 : vector<8x128xf32>
    %139 = math.tanh %138 : vector<8x128xf32>
    %cst_41 = arith.constant 1.000000e+00 : f32
    %140 = vector.broadcast %cst_41 : f32 to vector<8x128xf32>
    %141 = arith.subf %140, %134 : vector<8x128xf32>
    %142 = arith.mulf %141, %139 : vector<8x128xf32>
    %143 = arith.mulf %134, %118 : vector<8x128xf32>
    %144 = arith.addf %142, %143 : vector<8x128xf32>
    %c5_i32 = arith.constant 5 : i32
    %cst_42 = arith.constant dense<0.000000e+00> : vector<8x384xf32>
    %145 = tpu.matmul %144, %12, %cst_42 {dimension_numbers = #tpu.dot_dimension_numbers<[1], [0], [0], [1], [0, 0, 1, 1], [], []>} : vector<8x128xf32>, vector<128x384xf32>, vector<8x384xf32> -> vector<8x384xf32>
    %146 = vector.broadcast %13 : vector<1x384xf32> to vector<8x384xf32>
    %147 = arith.addf %145, %146 : vector<8x384xf32>
    %148 = arith.index_cast %c5_i32 : i32 to index
    %c0_43 = arith.constant 0 : index
    %c0_44 = arith.constant 0 : index
    %149 = vector.load %arg8[%148, %c0_43, %c0_44] : memref<8x8x384xf32, #tpu.memory_space<vmem>>, vector<1x8x384xf32>
    %150 = vector.shape_cast %149 : vector<1x8x384xf32> to vector<8x384xf32>
    %151 = vector.extract_strided_slice %150 {offsets = [0, 0], sizes = [8, 256], strides = [1, 1]} : vector<8x384xf32> to vector<8x256xf32>
    %152 = vector.extract_strided_slice %147 {offsets = [0, 0], sizes = [8, 256], strides = [1, 1]} : vector<8x384xf32> to vector<8x256xf32>
    %153 = arith.addf %151, %152 : vector<8x256xf32>
    %154 = arith.negf %153 : vector<8x256xf32>
    %155 = math.exp %154 : vector<8x256xf32>
    %cst_45 = arith.constant 1.000000e+00 : f32
    %156 = vector.broadcast %cst_45 : f32 to vector<8x256xf32>
    %157 = arith.addf %156, %155 : vector<8x256xf32>
    %158 = arith.divf %156, %157 : vector<8x256xf32>
    %159 = vector.extract_strided_slice %158 {offsets = [0, 0], sizes = [8, 128], strides = [1, 1]} : vector<8x256xf32> to vector<8x128xf32>
    %160 = vector.extract_strided_slice %158 {offsets = [0, 128], sizes = [8, 128], strides = [1, 1]} : vector<8x256xf32> to vector<8x128xf32>
    %161 = vector.extract_strided_slice %150 {offsets = [0, 256], sizes = [8, 128], strides = [1, 1]} : vector<8x384xf32> to vector<8x128xf32>
    %162 = vector.extract_strided_slice %147 {offsets = [0, 256], sizes = [8, 128], strides = [1, 1]} : vector<8x384xf32> to vector<8x128xf32>
    %163 = arith.mulf %159, %162 : vector<8x128xf32>
    %164 = arith.addf %161, %163 : vector<8x128xf32>
    %165 = math.tanh %164 : vector<8x128xf32>
    %cst_46 = arith.constant 1.000000e+00 : f32
    %166 = vector.broadcast %cst_46 : f32 to vector<8x128xf32>
    %167 = arith.subf %166, %160 : vector<8x128xf32>
    %168 = arith.mulf %167, %165 : vector<8x128xf32>
    %169 = arith.mulf %160, %144 : vector<8x128xf32>
    %170 = arith.addf %168, %169 : vector<8x128xf32>
    %c6_i32 = arith.constant 6 : i32
    %cst_47 = arith.constant dense<0.000000e+00> : vector<8x384xf32>
    %171 = tpu.matmul %170, %12, %cst_47 {dimension_numbers = #tpu.dot_dimension_numbers<[1], [0], [0], [1], [0, 0, 1, 1], [], []>} : vector<8x128xf32>, vector<128x384xf32>, vector<8x384xf32> -> vector<8x384xf32>
    %172 = vector.broadcast %13 : vector<1x384xf32> to vector<8x384xf32>
    %173 = arith.addf %171, %172 : vector<8x384xf32>
    %174 = arith.index_cast %c6_i32 : i32 to index
    %c0_48 = arith.constant 0 : index
    %c0_49 = arith.constant 0 : index
    %175 = vector.load %arg8[%174, %c0_48, %c0_49] : memref<8x8x384xf32, #tpu.memory_space<vmem>>, vector<1x8x384xf32>
    %176 = vector.shape_cast %175 : vector<1x8x384xf32> to vector<8x384xf32>
    %177 = vector.extract_strided_slice %176 {offsets = [0, 0], sizes = [8, 256], strides = [1, 1]} : vector<8x384xf32> to vector<8x256xf32>
    %178 = vector.extract_strided_slice %173 {offsets = [0, 0], sizes = [8, 256], strides = [1, 1]} : vector<8x384xf32> to vector<8x256xf32>
    %179 = arith.addf %177, %178 : vector<8x256xf32>
    %180 = arith.negf %179 : vector<8x256xf32>
    %181 = math.exp %180 : vector<8x256xf32>
    %cst_50 = arith.constant 1.000000e+00 : f32
    %182 = vector.broadcast %cst_50 : f32 to vector<8x256xf32>
    %183 = arith.addf %182, %181 : vector<8x256xf32>
    %184 = arith.divf %182, %183 : vector<8x256xf32>
    %185 = vector.extract_strided_slice %184 {offsets = [0, 0], sizes = [8, 128], strides = [1, 1]} : vector<8x256xf32> to vector<8x128xf32>
    %186 = vector.extract_strided_slice %184 {offsets = [0, 128], sizes = [8, 128], strides = [1, 1]} : vector<8x256xf32> to vector<8x128xf32>
    %187 = vector.extract_strided_slice %176 {offsets = [0, 256], sizes = [8, 128], strides = [1, 1]} : vector<8x384xf32> to vector<8x128xf32>
    %188 = vector.extract_strided_slice %173 {offsets = [0, 256], sizes = [8, 128], strides = [1, 1]} : vector<8x384xf32> to vector<8x128xf32>
    %189 = arith.mulf %185, %188 : vector<8x128xf32>
    %190 = arith.addf %187, %189 : vector<8x128xf32>
    %191 = math.tanh %190 : vector<8x128xf32>
    %cst_51 = arith.constant 1.000000e+00 : f32
    %192 = vector.broadcast %cst_51 : f32 to vector<8x128xf32>
    %193 = arith.subf %192, %186 : vector<8x128xf32>
    %194 = arith.mulf %193, %191 : vector<8x128xf32>
    %195 = arith.mulf %186, %170 : vector<8x128xf32>
    %196 = arith.addf %194, %195 : vector<8x128xf32>
    %c7_i32 = arith.constant 7 : i32
    %cst_52 = arith.constant dense<0.000000e+00> : vector<8x384xf32>
    %197 = tpu.matmul %196, %12, %cst_52 {dimension_numbers = #tpu.dot_dimension_numbers<[1], [0], [0], [1], [0, 0, 1, 1], [], []>} : vector<8x128xf32>, vector<128x384xf32>, vector<8x384xf32> -> vector<8x384xf32>
    %198 = vector.broadcast %13 : vector<1x384xf32> to vector<8x384xf32>
    %199 = arith.addf %197, %198 : vector<8x384xf32>
    %200 = arith.index_cast %c7_i32 : i32 to index
    %c0_53 = arith.constant 0 : index
    %c0_54 = arith.constant 0 : index
    %201 = vector.load %arg8[%200, %c0_53, %c0_54] : memref<8x8x384xf32, #tpu.memory_space<vmem>>, vector<1x8x384xf32>
    %202 = vector.shape_cast %201 : vector<1x8x384xf32> to vector<8x384xf32>
    %203 = vector.extract_strided_slice %202 {offsets = [0, 0], sizes = [8, 256], strides = [1, 1]} : vector<8x384xf32> to vector<8x256xf32>
    %204 = vector.extract_strided_slice %199 {offsets = [0, 0], sizes = [8, 256], strides = [1, 1]} : vector<8x384xf32> to vector<8x256xf32>
    %205 = arith.addf %203, %204 : vector<8x256xf32>
    %206 = arith.negf %205 : vector<8x256xf32>
    %207 = math.exp %206 : vector<8x256xf32>
    %cst_55 = arith.constant 1.000000e+00 : f32
    %208 = vector.broadcast %cst_55 : f32 to vector<8x256xf32>
    %209 = arith.addf %208, %207 : vector<8x256xf32>
    %210 = arith.divf %208, %209 : vector<8x256xf32>
    %211 = vector.extract_strided_slice %210 {offsets = [0, 0], sizes = [8, 128], strides = [1, 1]} : vector<8x256xf32> to vector<8x128xf32>
    %212 = vector.extract_strided_slice %210 {offsets = [0, 128], sizes = [8, 128], strides = [1, 1]} : vector<8x256xf32> to vector<8x128xf32>
    %213 = vector.extract_strided_slice %202 {offsets = [0, 256], sizes = [8, 128], strides = [1, 1]} : vector<8x384xf32> to vector<8x128xf32>
    %214 = vector.extract_strided_slice %199 {offsets = [0, 256], sizes = [8, 128], strides = [1, 1]} : vector<8x384xf32> to vector<8x128xf32>
    %215 = arith.mulf %211, %214 : vector<8x128xf32>
    %216 = arith.addf %213, %215 : vector<8x128xf32>
    %217 = math.tanh %216 : vector<8x128xf32>
    %cst_56 = arith.constant 1.000000e+00 : f32
    %218 = vector.broadcast %cst_56 : f32 to vector<8x128xf32>
    %219 = arith.subf %218, %212 : vector<8x128xf32>
    %220 = arith.mulf %219, %217 : vector<8x128xf32>
    %221 = arith.mulf %212, %196 : vector<8x128xf32>
    %222 = arith.addf %220, %221 : vector<8x128xf32>
    %c8_i32 = arith.constant 8 : i32
    %c0_57 = arith.constant 0 : index
    %c0_58 = arith.constant 0 : index
    %223 = vector.load %arg7[%c0_57, %c0_58] : memref<8x128xf32, #tpu.memory_space<vmem>>, vector<8x128xf32>
    tpu.vector_store %arg7[%c0_57, %c0_58], %222 {strides = array<i32>} : memref<8x128xf32, #tpu.memory_space<vmem>>, vector<8x128xf32>,
    return
  }
  func.func @transform_0(%arg0: i32, %arg1: i32) -> (i32, i32, i32) {
    %c0_i32 = arith.constant 0 : i32
    %c0_i32_0 = arith.constant 0 : i32
    return %arg1, %arg0, %c0_i32 : i32, i32, i32
  }
  func.func @transform_1(%arg0: i32, %arg1: i32) -> (i32, i32) {
    %c0_i32 = arith.constant 0 : i32
    %c0_i32_0 = arith.constant 0 : i32
    %c0_i32_1 = arith.constant 0 : i32
    return %c0_i32, %c0_i32_0 : i32, i32
  }
  func.func @transform_2(%arg0: i32, %arg1: i32) -> (i32, i32) {
    %c0_i32 = arith.constant 0 : i32
    %c0_i32_0 = arith.constant 0 : i32
    %c0_i32_1 = arith.constant 0 : i32
    return %c0_i32, %c0_i32_0 : i32, i32
  }
  func.func @transform_3(%arg0: i32, %arg1: i32) -> (i32, i32) {
    %c0_i32 = arith.constant 0 : i32
    %c0_i32_0 = arith.constant 0 : i32
    %c0_i32_1 = arith.constant 0 : i32
    return %c0_i32, %c0_i32_0 : i32, i32
  }
  func.func @transform_4(%arg0: i32, %arg1: i32) -> (i32, i32) {
    %c0_i32 = arith.constant 0 : i32
    %c0_i32_0 = arith.constant 0 : i32
    %c0_i32_1 = arith.constant 0 : i32
    return %c0_i32, %c0_i32_0 : i32, i32
  }
  func.func @transform_5(%arg0: i32, %arg1: i32) -> (i32, i32) {
    %c0_i32 = arith.constant 0 : i32
    %c0_i32_0 = arith.constant 0 : i32
    return %arg0, %c0_i32 : i32, i32
  }
}

</mosaic_0001>

<llo_original>
// kernel: tpu_custom_call.1
$region0: #{tpu_custom_call.1}
  #allocation0 [shape = 'u32[]', space=smem, size = 0x4, offset = 0x4, fixed_abs, tag = 'smem constant byte address 0x4 - core index']
  #allocation1 [shape = 'u32[72,128]{1,0:T(1,128)}', space=vmem, size = 0x9000, scoped, tag = 'internal scratch']
  #allocation2 [shape = 'f32[8,8,384]{2,1,0:T(8,128)}', space=vmem, size = 0x18000, scoped, tag = 'scratch operand']
  %s0 = inlined_call_operand.hbm [shape: f32[8,8,16], index: 0, kind: input, shape index: {}]
  %s1 = inlined_call_operand.hbm [shape: f32[16,384], index: 1, kind: input, shape index: {}]
  %s2 = inlined_call_operand.hbm [shape: f32[1,384], index: 2, kind: input, shape index: {}]
  %s3 = inlined_call_operand.hbm [shape: f32[128,384], index: 3, kind: input, shape index: {}]
  %s4 = inlined_call_operand.vmem [shape: f32[1,384], index: 4, kind: input, shape index: {}]
  %s5 = inlined_call_operand.hbm [shape: f32[8,128], index: 5, kind: output, shape index: {}]
  %s6 = sld [smem:[#allocation0]]
  $region50: #{tpu_custom_call.1} parent=0
    _
  %s8 = ssub.s32 1, %s6
  %s9 = scalar_select 0, %s8, %s6
  $region1: #{tpu_custom_call.1} parent=0
    #allocation3 [shape = 'u8[32768]{0}', space=vmem, size = 0x8000, scoped, tag = 'input window, operand 0, single buffered']
    #allocation4 [shape = 's32[1]{0}', space=sflag, size = 0x4, scoped, tag = 'scoped memory for tpu_custom_call.1']
    #allocation5 [shape = 's32[1]{0}', space=sflag, size = 0x4, scoped, tag = 'scoped memory for tpu_custom_call.1']
    #allocation6 [shape = 'u8[24576]{0}', space=vmem, size = 0x6000, scoped, tag = 'input window, operand 1, single buffered']
    #allocation7 [shape = 's32[1]{0}', space=sflag, size = 0x4, scoped, tag = 'scoped memory for tpu_custom_call.1']
    #allocation8 [shape = 'u8[1536]{0}', space=vmem, size = 0x800, scoped, tag = 'input window, operand 2, single buffered']
    #allocation9 [shape = 'u8[196608]{0}', space=vmem, size = 0x30000, scoped, tag = 'input window, operand 3, single buffered']
    #allocation10 [shape = 's32[1]{0}', space=sflag, size = 0x4, scoped, tag = 'scoped memory for tpu_custom_call.1']
    #allocation11 [shape = 'u8[4096]{0}', space=vmem, size = 0x1000, scoped, tag = 'output window, operand 0, single buffered']
    %10 = vsyncpa [#allocation4], 0
    %11 = vsyncpa [#allocation7], 0
    %12 = vsyncpa [#allocation10], 0
    %13 = vsyncpa [#allocation5], 0
    // Predicated region
    $region2: #{tpu_custom_call.1} parent=1 // pred_check
      _
    $region3: #{tpu_custom_call.1} parent=1 // pred_check_branch
      %15 = sbr.rel (0) target = $region5
    $region4: #{tpu_custom_call.1} parent=1 // pred_region
      %17 = vsyncadd [#allocation4], 0
      %s18 = sshll.u32 %s0, 4
      %s19 = int_to_ptr.hbm [resolvable:$true] %s18
      %s20 = sshll.u32 [#allocation3], 4
      %s21 = int_to_ptr.vmem [resolvable:$true] %s20
      %26 = dma.hbm_to_vmem [thread:$0]  %s19, 1024, %s21, [#allocation4], 128, 128, 8
    $region5: #{tpu_custom_call.1} parent=1 // pred_fallthru
      _
    // Predicated region
    $region6: #{tpu_custom_call.1} parent=1 // pred_check
      _
    $region7: #{tpu_custom_call.1} parent=1 // pred_check_branch
      %28 = sbr.rel (0) target = $region9
    $region8: #{tpu_custom_call.1} parent=1 // pred_region
      %30 = vsyncadd [#allocation7], 0
      %s31 = sshll.u32 %s1, 4
      %s32 = int_to_ptr.hbm [resolvable:$true] %s31
      %s33 = sshll.u32 [#allocation6], 4
      %s34 = int_to_ptr.vmem [resolvable:$true] %s33
      %39 = dma.hbm_to_vmem [thread:$0]  %s32, 768, %s34, [#allocation7], 384, 384, 24
    $region9: #{tpu_custom_call.1} parent=1 // pred_fallthru
      _
    // Predicated region
    $region10: #{tpu_custom_call.1} parent=1 // pred_check
      _
    $region11: #{tpu_custom_call.1} parent=1 // pred_check_branch
      %41 = sbr.rel (0) target = $region13
    $region12: #{tpu_custom_call.1} parent=1 // pred_region
      %43 = vsyncadd [#allocation7], 0
      %s45 = sshll.u32 %s2, 4
      %s46 = int_to_ptr.hbm [resolvable:$true] %s45
      %s47 = sshll.u32 [#allocation8], 4
      %s48 = int_to_ptr.vmem [resolvable:$true] %s47
      %50 = dma.hbm_to_vmem [thread:$0]  %s46, 48, %s48, [#allocation7]
    $region13: #{tpu_custom_call.1} parent=1 // pred_fallthru
      _
    // Predicated region
    $region14: #{tpu_custom_call.1} parent=1 // pred_check
      _
    $region15: #{tpu_custom_call.1} parent=1 // pred_check_branch
      %52 = sbr.rel (0) target = $region17
    $region16: #{tpu_custom_call.1} parent=1 // pred_region
      %54 = vsyncadd [#allocation10], 0
      %s55 = sshll.u32 %s3, 4
      %s56 = int_to_ptr.hbm [resolvable:$true] %s55
      %s57 = sshll.u32 [#allocation9], 4
      %s58 = int_to_ptr.vmem [resolvable:$true] %s57
      %63 = dma.hbm_to_vmem [thread:$0]  %s56, 6144, %s58, [#allocation10], 384, 384, 24
    $region17: #{tpu_custom_call.1} parent=1 // pred_fallthru
      _
    // Predicated region
    $region18: #{tpu_custom_call.1} parent=1 // pred_check
      _
    $region19: #{tpu_custom_call.1} parent=1 // pred_check_branch
      %65 = sbr.rel (0) target = $region21
    $region20: #{tpu_custom_call.1} parent=1 // pred_region
      _
    $region21: #{tpu_custom_call.1} parent=1 // pred_fallthru
      _
    // Predicated region
    $region22: #{tpu_custom_call.1} parent=1 // pred_check
      _
    $region23: #{tpu_custom_call.1} parent=1 // pred_check_branch
      %67 = sbr.rel (0) target = $region25
    $region24: #{tpu_custom_call.1} parent=1 // pred_region
      %69 = dma.done [#allocation4], 1024
    $region25: #{tpu_custom_call.1} parent=1 // pred_fallthru
      _
    // Predicated region
    $region26: #{tpu_custom_call.1} parent=1 // pred_check
      _
    $region27: #{tpu_custom_call.1} parent=1 // pred_check_branch
      %71 = sbr.rel (0) target = $region29
    $region28: #{tpu_custom_call.1} parent=1 // pred_region
      %73 = dma.done [#allocation7], 768
    $region29: #{tpu_custom_call.1} parent=1 // pred_fallthru
      _
    // Predicated region
    $region30: #{tpu_custom_call.1} parent=1 // pred_check
      _
    $region31: #{tpu_custom_call.1} parent=1 // pred_check_branch
      %75 = sbr.rel (0) target = $region33
    $region32: #{tpu_custom_call.1} parent=1 // pred_region
      %77 = dma.done [#allocation7], 48
    $region33: #{tpu_custom_call.1} parent=1 // pred_fallthru
      _
    // Predicated region
    $region34: #{tpu_custom_call.1} parent=1 // pred_check
      _
    $region35: #{tpu_custom_call.1} parent=1 // pred_check_branch
      %79 = sbr.rel (0) target = $region37
    $region36: #{tpu_custom_call.1} parent=1 // pred_region
      %81 = dma.done [#allocation10], 6144
    $region37: #{tpu_custom_call.1} parent=1 // pred_fallthru
      _
    %p82 = scmp.eq.s32.totalorder 0, 0
    // Predicated region
    $region38: #{tpu_custom_call.1} parent=1 // pred_check
      %p83 = pneg %p82
    $region39: #{tpu_custom_call.1} parent=1 // pred_check_branch
      %85 = sbr.rel (%p83) target = $region41
    $region40: #{tpu_custom_call.1} parent=1 // pred_region
      %86 = vst [vmem:[#allocation11] sm:$0xff] 0.0
    $region41: #{tpu_custom_call.1} parent=1 // pred_fallthru
      _
    %v87 = vld [vmem:[#allocation3] sm:$0xff]
    %v88 = vld [vmem:[#allocation3 + $0x8] sm:$0xff]
    %v89 = vld [vmem:[#allocation3 + $0x10] sm:$0xff]
    %v90 = vld [vmem:[#allocation3 + $0x18] sm:$0xff]
    %v91 = vld [vmem:[#allocation3 + $0x20] sm:$0xff]
    %v92 = vld [vmem:[#allocation3 + $0x28] sm:$0xff]
    %v93 = vld [vmem:[#allocation3 + $0x30] sm:$0xff]
    %v94 = vld [vmem:[#allocation3 + $0x38] sm:$0xff]
    %v95 = vld [vmem:[#allocation6] sm:$0xff]
    %v96 = vld [vmem:[#allocation6 + $0x8] sm:$0xff]
    %v97 = vld [vmem:[#allocation6 + $0x10] sm:$0xff]
    %v98 = vld [vmem:[#allocation6 + $0x18] sm:$0xff]
    %v99 = vld [vmem:[#allocation6 + $0x20] sm:$0xff]
    %v100 = vld [vmem:[#allocation6 + $0x28] sm:$0xff]
    %v101 = vld [vmem:[#allocation8] sm:$0x7]
    %v103 = vperm.slane %v101, 0
    %v104 = vperm.slane %v101, 1
    %v105 = vperm.slane %v101, 2
    %vm109 = vcmask 130048
    %v111 = vsel %vm109, %v87, 0
    %v114 = vsel %vm109, %v88, 0
    %v117 = vsel %vm109, %v89, 0
    %v120 = vsel %vm109, %v90, 0
    %v123 = vsel %vm109, %v91, 0
    %v126 = vsel %vm109, %v92, 0
    %v129 = vsel %vm109, %v93, 0
    %v132 = vsel %vm109, %v94, 0
    %134 = vmatpush.msra.mxu0 0.0
    %135 = vmatpush.msra.mxu0 0.0
    %136 = vmatpush.msra.mxu0 0.0
    %137 = vmatpush.msra.mxu0 0.0
    %138 = vmatpush.msra.mxu0 0.0
    %139 = vmatpush.msra.mxu0 0.0
    %140 = vmatpush.msra.mxu0 0.0
    %141 = vmatpush.msra.mxu0 0.0
    %142 = vmatpush.msra.mxu0 0.0
    %143 = vmatpush.msra.mxu0 0.0
    %144 = vmatpush.msra.mxu0 0.0
    %145 = vmatpush.msra.mxu0 0.0
    %146 = vmatpush.msra.mxu0 0.0
    %147 = vmatpush.msra.mxu0 0.0
    %148 = vmatpush.msra.mxu0 %v98
    %149 = vmatpush.msra.mxu0 %v95
    %150 = vmatmul.f32.gmra.mxu0 %v111
    %v151 = vpop.f32.mrf.mxu0
    %v152 = vadd.f32 %v103, %v151
    %153 = vmatmul.f32.gmra.mxu0 %v114
    %v154 = vpop.f32.mrf.mxu0
    %v155 = vadd.f32 %v103, %v154
    %156 = vmatmul.f32.gmra.mxu0 %v117
    %v157 = vpop.f32.mrf.mxu0
    %v158 = vadd.f32 %v103, %v157
    %159 = vmatmul.f32.gmra.mxu0 %v120
    %v160 = vpop.f32.mrf.mxu0
    %v161 = vadd.f32 %v103, %v160
    %162 = vmatmul.f32.gmra.mxu0 %v123
    %v163 = vpop.f32.mrf.mxu0
    %v164 = vadd.f32 %v103, %v163
    %165 = vmatmul.f32.gmra.mxu0 %v126
    %v166 = vpop.f32.mrf.mxu0
    %v167 = vadd.f32 %v103, %v166
    %168 = vmatmul.f32.gmra.mxu0 %v129
    %v169 = vpop.f32.mrf.mxu0
    %v170 = vadd.f32 %v103, %v169
    %171 = vmatmul.f32.gmra.mxu0 %v132
    %v172 = vpop.f32.mrf.mxu0
    %v173 = vadd.f32 %v103, %v172
    %174 = vdwg.mxu0
    %175 = vmatpush.msra.mxu0 0.0
    %176 = vmatpush.msra.mxu0 0.0
    %177 = vmatpush.msra.mxu0 0.0
    %178 = vmatpush.msra.mxu0 0.0
    %179 = vmatpush.msra.mxu0 0.0
    %180 = vmatpush.msra.mxu0 0.0
    %181 = vmatpush.msra.mxu0 0.0
    %182 = vmatpush.msra.mxu0 0.0
    %183 = vmatpush.msra.mxu0 0.0
    %184 = vmatpush.msra.mxu0 0.0
    %185 = vmatpush.msra.mxu0 0.0
    %186 = vmatpush.msra.mxu0 0.0
    %187 = vmatpush.msra.mxu0 0.0
    %188 = vmatpush.msra.mxu0 0.0
    %189 = vmatpush.msra.mxu0 %v99
    %190 = vmatpush.msra.mxu0 %v96
    %191 = vmatmul.f32.gmra.mxu0 %v111
    %v192 = vpop.f32.mrf.mxu0
    %v193 = vadd.f32 %v104, %v192
    %194 = vmatmul.f32.gmra.mxu0 %v114
    %v195 = vpop.f32.mrf.mxu0
    %v196 = vadd.f32 %v104, %v195
    %197 = vmatmul.f32.gmra.mxu0 %v117
    %v198 = vpop.f32.mrf.mxu0
    %v199 = vadd.f32 %v104, %v198
    %200 = vmatmul.f32.gmra.mxu0 %v120
    %v201 = vpop.f32.mrf.mxu0
    %v202 = vadd.f32 %v104, %v201
    %203 = vmatmul.f32.gmra.mxu0 %v123
    %v204 = vpop.f32.mrf.mxu0
    %v205 = vadd.f32 %v104, %v204
    %206 = vmatmul.f32.gmra.mxu0 %v126
    %v207 = vpop.f32.mrf.mxu0
    %v208 = vadd.f32 %v104, %v207
    %209 = vmatmul.f32.gmra.mxu0 %v129
    %v210 = vpop.f32.mrf.mxu0
    %v211 = vadd.f32 %v104, %v210
    %212 = vmatmul.f32.gmra.mxu0 %v132
    %v213 = vpop.f32.mrf.mxu0
    %v214 = vadd.f32 %v104, %v213
    %215 = vdwg.mxu0
    %216 = vmatpush.msra.mxu0 0.0
    %217 = vmatpush.msra.mxu0 0.0
    %218 = vmatpush.msra.mxu0 0.0
    %219 = vmatpush.msra.mxu0 0.0
    %220 = vmatpush.msra.mxu0 0.0
    %221 = vmatpush.msra.mxu0 0.0
    %222 = vmatpush.msra.mxu0 0.0
    %223 = vmatpush.msra.mxu0 0.0
    %224 = vmatpush.msra.mxu0 0.0
    %225 = vmatpush.msra.mxu0 0.0
    %226 = vmatpush.msra.mxu0 0.0
    %227 = vmatpush.msra.mxu0 0.0
    %228 = vmatpush.msra.mxu0 0.0
    %229 = vmatpush.msra.mxu0 0.0
    %230 = vmatpush.msra.mxu0 %v100
    %231 = vmatpush.msra.mxu0 %v97
    %232 = vmatmul.f32.gmra.mxu0 %v111
    %v233 = vpop.f32.mrf.mxu0
    %v234 = vadd.f32 %v105, %v233
    %235 = vmatmul.f32.gmra.mxu0 %v114
    %v236 = vpop.f32.mrf.mxu0
    %v237 = vadd.f32 %v105, %v236
    %238 = vmatmul.f32.gmra.mxu0 %v117
    %v239 = vpop.f32.mrf.mxu0
    %v240 = vadd.f32 %v105, %v239
    %241 = vmatmul.f32.gmra.mxu0 %v120
    %v242 = vpop.f32.mrf.mxu0
    %v243 = vadd.f32 %v105, %v242
    %244 = vmatmul.f32.gmra.mxu0 %v123
    %v245 = vpop.f32.mrf.mxu0
    %v246 = vadd.f32 %v105, %v245
    %247 = vmatmul.f32.gmra.mxu0 %v126
    %v248 = vpop.f32.mrf.mxu0
    %v249 = vadd.f32 %v105, %v248
    %250 = vmatmul.f32.gmra.mxu0 %v129
    %v251 = vpop.f32.mrf.mxu0
    %v252 = vadd.f32 %v105, %v251
    %253 = vmatmul.f32.gmra.mxu0 %v132
    %v254 = vpop.f32.mrf.mxu0
    %v255 = vadd.f32 %v105, %v254
    %256 = vdwg.mxu0
    %257 = vst [vmem:[#allocation2] sm:$0xff] %v152
    %258 = vst [vmem:[#allocation2 + $0x8] sm:$0xff] %v193
    %259 = vst [vmem:[#allocation2 + $0x10] sm:$0xff] %v234
    %260 = vst [vmem:[#allocation2 + $0x18] sm:$0xff] %v155
    %261 = vst [vmem:[#allocation2 + $0x20] sm:$0xff] %v196
    %262 = vst [vmem:[#allocation2 + $0x28] sm:$0xff] %v237
    %263 = vst [vmem:[#allocation2 + $0x30] sm:$0xff] %v158
    %264 = vst [vmem:[#allocation2 + $0x38] sm:$0xff] %v199
    %265 = vst [vmem:[#allocation2 + $0x40] sm:$0xff] %v240
    %266 = vst [vmem:[#allocation2 + $0x48] sm:$0xff] %v161
    %267 = vst [vmem:[#allocation2 + $0x50] sm:$0xff] %v202
    %268 = vst [vmem:[#allocation2 + $0x58] sm:$0xff] %v243
    %269 = vst [vmem:[#allocation2 + $0x60] sm:$0xff] %v164
    %270 = vst [vmem:[#allocation2 + $0x68] sm:$0xff] %v205
    %271 = vst [vmem:[#allocation2 + $0x70] sm:$0xff] %v246
    %272 = vst [vmem:[#allocation2 + $0x78] sm:$0xff] %v167
    %273 = vst [vmem:[#allocation2 + $0x80] sm:$0xff] %v208
    %274 = vst [vmem:[#allocation2 + $0x88] sm:$0xff] %v249
    %275 = vst [vmem:[#allocation2 + $0x90] sm:$0xff] %v170
    %276 = vst [vmem:[#allocation2 + $0x98] sm:$0xff] %v211
    %277 = vst [vmem:[#allocation2 + $0xa0] sm:$0xff] %v252
    %278 = vst [vmem:[#allocation2 + $0xa8] sm:$0xff] %v173
    %279 = vst [vmem:[#allocation2 + $0xb0] sm:$0xff] %v214
    %280 = vst [vmem:[#allocation2 + $0xb8] sm:$0xff] %v255
    %v281 = vld [vmem:[#allocation9] sm:$0xff]
    %v282 = vld [vmem:[#allocation9 + $0x8] sm:$0xff]
    %v283 = vld [vmem:[#allocation9 + $0x10] sm:$0xff]
    %v284 = vld [vmem:[#allocation9 + $0x18] sm:$0xff]
    %v285 = vld [vmem:[#allocation9 + $0x20] sm:$0xff]
    %v286 = vld [vmem:[#allocation9 + $0x28] sm:$0xff]
    %v287 = vld [vmem:[#allocation9 + $0x30] sm:$0xff]
    %v288 = vld [vmem:[#allocation9 + $0x38] sm:$0xff]
    %v289 = vld [vmem:[#allocation9 + $0x40] sm:$0xff]
    %v290 = vld [vmem:[#allocation9 + $0x48] sm:$0xff]
    %v291 = vld [vmem:[#allocation9 + $0x50] sm:$0xff]
    %v292 = vld [vmem:[#allocation9 + $0x58] sm:$0xff]
    %v293 = vld [vmem:[#allocation9 + $0x60] sm:$0xff]
    %v294 = vld [vmem:[#allocation9 + $0x68] sm:$0xff]
    %v295 = vld [vmem:[#allocation9 + $0x70] sm:$0xff]
    %v296 = vld [vmem:[#allocation9 + $0x78] sm:$0xff]
    %v297 = vld [vmem:[#allocation9 + $0x80] sm:$0xff]
    %v298 = vld [vmem:[#allocation9 + $0x88] sm:$0xff]
    %v299 = vld [vmem:[#allocation9 + $0x90] sm:$0xff]
    %v300 = vld [vmem:[#allocation9 + $0x98] sm:$0xff]
    %v301 = vld [vmem:[#allocation9 + $0xa0] sm:$0xff]
    %v302 = vld [vmem:[#allocation9 + $0xa8] sm:$0xff]
    %v303 = vld [vmem:[#allocation9 + $0xb0] sm:$0xff]
    %v304 = vld [vmem:[#allocation9 + $0xb8] sm:$0xff]
    %v305 = vld [vmem:[#allocation9 + $0xc0] sm:$0xff]
    %v306 = vld [vmem:[#allocation9 + $0xc8] sm:$0xff]
    %v307 = vld [vmem:[#allocation9 + $0xd0] sm:$0xff]
    %v308 = vld [vmem:[#allocation9 + $0xd8] sm:$0xff]
    %v309 = vld [vmem:[#allocation9 + $0xe0] sm:$0xff]
    %v310 = vld [vmem:[#allocation9 + $0xe8] sm:$0xff]
    %v311 = vld [vmem:[#allocation9 + $0xf0] sm:$0xff]
    %v312 = vld [vmem:[#allocation9 + $0xf8] sm:$0xff]
    %v313 = vld [vmem:[#allocation9 + $0x100] sm:$0xff]
    %v314 = vld [vmem:[#allocation9 + $0x108] sm:$0xff]
    %v315 = vld [vmem:[#allocation9 + $0x110] sm:$0xff]
    %v316 = vld [vmem:[#allocation9 + $0x118] sm:$0xff]
    %v317 = vld [vmem:[#allocation9 + $0x120] sm:$0xff]
    %v318 = vld [vmem:[#allocation9 + $0x128] sm:$0xff]
    %v319 = vld [vmem:[#allocation9 + $0x130] sm:$0xff]
    %v320 = vld [vmem:[#allocation9 + $0x138] sm:$0xff]
    %v321 = vld [vmem:[#allocation9 + $0x140] sm:$0xff]
    %v322 = vld [vmem:[#allocation9 + $0x148] sm:$0xff]
    %v323 = vld [vmem:[#allocation9 + $0x150] sm:$0xff]
    %v324 = vld [vmem:[#allocation9 + $0x158] sm:$0xff]
    %v325 = vld [vmem:[#allocation9 + $0x160] sm:$0xff]
    %v326 = vld [vmem:[#allocation9 + $0x168] sm:$0xff]
    %v327 = vld [vmem:[#allocation9 + $0x170] sm:$0xff]
    %v328 = vld [vmem:[#allocation9 + $0x178] sm:$0xff]
    %v329 = vld [vmem:[%s4] sm:$0x7]
    %v330 = vld [vmem:[#allocation11] sm:$0xff]
    %v332 = vperm.slane %v329, 0
    %v333 = vperm.slane %v329, 1
    %v334 = vperm.slane %v329, 2
    %338 = vmatpush.msra.mxu0 %v326
    %339 = vmatpush.msra.mxu0 %v323
    %340 = vmatpush.msra.mxu0 %v320
    %341 = vmatpush.msra.mxu0 %v317
    %342 = vmatpush.msra.mxu0 %v314
    %343 = vmatpush.msra.mxu0 %v311
    %344 = vmatpush.msra.mxu0 %v308
    %345 = vmatpush.msra.mxu0 %v305
    %346 = vmatpush.msra.mxu0 %v302
    %347 = vmatpush.msra.mxu0 %v299
    %348 = vmatpush.msra.mxu0 %v296
    %349 = vmatpush.msra.mxu0 %v293
    %350 = vmatpush.msra.mxu0 %v290
    %351 = vmatpush.msra.mxu0 %v287
    %352 = vmatpush.msra.mxu0 %v284
    %353 = vmatpush.msra.mxu0 %v281
    %354 = vmatmul.f32.gmra.mxu0 %v330
    %v355 = vpop.f32.mrf.mxu0
    %v356 = vadd.f32 %v332, %v355
    %357 = vdwg.mxu0
    %358 = vmatpush.msra.mxu0 %v327
    %359 = vmatpush.msra.mxu0 %v324
    %360 = vmatpush.msra.mxu0 %v321
    %361 = vmatpush.msra.mxu0 %v318
    %362 = vmatpush.msra.mxu0 %v315
    %363 = vmatpush.msra.mxu0 %v312
    %364 = vmatpush.msra.mxu0 %v309
    %365 = vmatpush.msra.mxu0 %v306
    %366 = vmatpush.msra.mxu0 %v303
    %367 = vmatpush.msra.mxu0 %v300
    %368 = vmatpush.msra.mxu0 %v297
    %369 = vmatpush.msra.mxu0 %v294
    %370 = vmatpush.msra.mxu0 %v291
    %371 = vmatpush.msra.mxu0 %v288
    %372 = vmatpush.msra.mxu0 %v285
    %373 = vmatpush.msra.mxu0 %v282
    %374 = vmatmul.f32.gmra.mxu0 %v330
    %v375 = vpop.f32.mrf.mxu0
    %v376 = vadd.f32 %v333, %v375
    %377 = vdwg.mxu0
    %378 = vmatpush.msra.mxu0 %v328
    %379 = vmatpush.msra.mxu0 %v325
    %380 = vmatpush.msra.mxu0 %v322
    %381 = vmatpush.msra.mxu0 %v319
    %382 = vmatpush.msra.mxu0 %v316
    %383 = vmatpush.msra.mxu0 %v313
    %384 = vmatpush.msra.mxu0 %v310
    %385 = vmatpush.msra.mxu0 %v307
    %386 = vmatpush.msra.mxu0 %v304
    %387 = vmatpush.msra.mxu0 %v301
    %388 = vmatpush.msra.mxu0 %v298
    %389 = vmatpush.msra.mxu0 %v295
    %390 = vmatpush.msra.mxu0 %v292
    %391 = vmatpush.msra.mxu0 %v289
    %392 = vmatpush.msra.mxu0 %v286
    %393 = vmatpush.msra.mxu0 %v283
    %394 = vmatmul.f32.gmra.mxu0 %v330
    %v395 = vpop.f32.mrf.mxu0
    %v396 = vadd.f32 %v334, %v395
    %397 = vdwg.mxu0
    %v398 = vld [vmem:[#allocation2] sm:$0xff]
    %v399 = vld [vmem:[#allocation2 + $0x8] sm:$0xff]
    %v400 = vld [vmem:[#allocation2 + $0x10] sm:$0xff]
    %v401 = vadd.f32 %v398, %v356
    %v402 = vadd.f32 %v399, %v376
    %v403 = vxor.u32 %v401, 2147483648
    %v404 = vxor.u32 %v402, 2147483648
    %v405 = vmul.f32 %v403, 1.442695
    %v406 = vpow.pop %v405
    %v407 = vmul.f32 %v404, 1.442695
    %v408 = vpow.pop %v407
    %v409 = vadd.f32 %v406, 1.0
    %v410 = vadd.f32 %v408, 1.0
    %v411 = vrcp.pop %v409
    %v412 = vmul.f32 %v409, %v411
    %v413 = vsub.f32 1.0, %v412
    %v414 = vmul.f32 %v411, %v413
    %v415 = vadd.f32 %v411, %v414
    %vm416 = vweird.f32 %v409
    %vm417 = vweird.f32 %v411
    %vm418 = vmor %vm416, %vm417
    %v419 = vsel %vm418, %v411, %v415
    %v420 = vand.u32 2147483647, %v409
    %vm421 = vcmp.eq.f32.partialorder %v420, 8.507059e+37
    %v422 = vand.u32 %v409, 2147483648
    %v423 = vor.u32 1.1754944e-38, %v422
    %v424 = vsel %vm421, %v423, %v419
    %v425 = vmul.f32 1.0, %v424
    %v426 = vrcp.pop %v410
    %v427 = vmul.f32 %v410, %v426
    %v428 = vsub.f32 1.0, %v427
    %v429 = vmul.f32 %v426, %v428
    %v430 = vadd.f32 %v426, %v429
    %vm431 = vweird.f32 %v410
    %vm432 = vweird.f32 %v426
    %vm433 = vmor %vm431, %vm432
    %v434 = vsel %vm433, %v426, %v430
    %v435 = vand.u32 2147483647, %v410
    %vm436 = vcmp.eq.f32.partialorder %v435, 8.507059e+37
    %v437 = vand.u32 %v410, 2147483648
    %v438 = vor.u32 1.1754944e-38, %v437
    %v439 = vsel %vm436, %v438, %v434
    %v440 = vmul.f32 1.0, %v439
    %v441 = vmul.f32 %v425, %v396
    %v442 = vadd.f32 %v400, %v441
    %v443 = vtanh.pop %v442
    %v444 = vsub.f32 1.0, %v440
    %v445 = vmul.f32 %v444, %v443
    %v446 = vmul.f32 %v440, %v330
    %v447 = vadd.f32 %v445, %v446
    %448 = vmatpush.msra.mxu0 %v326
    %449 = vmatpush.msra.mxu0 %v323
    %450 = vmatpush.msra.mxu0 %v320
    %451 = vmatpush.msra.mxu0 %v317
    %452 = vmatpush.msra.mxu0 %v314
    %453 = vmatpush.msra.mxu0 %v311
    %454 = vmatpush.msra.mxu0 %v308
    %455 = vmatpush.msra.mxu0 %v305
    %456 = vmatpush.msra.mxu0 %v302
    %457 = vmatpush.msra.mxu0 %v299
    %458 = vmatpush.msra.mxu0 %v296
    %459 = vmatpush.msra.mxu0 %v293
    %460 = vmatpush.msra.mxu0 %v290
    %461 = vmatpush.msra.mxu0 %v287
    %462 = vmatpush.msra.mxu0 %v284
    %463 = vmatpush.msra.mxu0 %v281
    %464 = vmatmul.f32.gmra.mxu0 %v447
    %v465 = vpop.f32.mrf.mxu0
    %v466 = vadd.f32 %v332, %v465
    %467 = vdwg.mxu0
    %468 = vmatpush.msra.mxu0 %v327
    %469 = vmatpush.msra.mxu0 %v324
    %470 = vmatpush.msra.mxu0 %v321
    %471 = vmatpush.msra.mxu0 %v318
    %472 = vmatpush.msra.mxu0 %v315
    %473 = vmatpush.msra.mxu0 %v312
    %474 = vmatpush.msra.mxu0 %v309
    %475 = vmatpush.msra.mxu0 %v306
    %476 = vmatpush.msra.mxu0 %v303
    %477 = vmatpush.msra.mxu0 %v300
    %478 = vmatpush.msra.mxu0 %v297
    %479 = vmatpush.msra.mxu0 %v294
    %480 = vmatpush.msra.mxu0 %v291
    %481 = vmatpush.msra.mxu0 %v288
    %482 = vmatpush.msra.mxu0 %v285
    %483 = vmatpush.msra.mxu0 %v282
    %484 = vmatmul.f32.gmra.mxu0 %v447
    %v485 = vpop.f32.mrf.mxu0
    %v486 = vadd.f32 %v333, %v485
    %487 = vdwg.mxu0
    %488 = vmatpush.msra.mxu0 %v328
    %489 = vmatpush.msra.mxu0 %v325
    %490 = vmatpush.msra.mxu0 %v322
    %491 = vmatpush.msra.mxu0 %v319
    %492 = vmatpush.msra.mxu0 %v316
    %493 = vmatpush.msra.mxu0 %v313
    %494 = vmatpush.msra.mxu0 %v310
    %495 = vmatpush.msra.mxu0 %v307
    %496 = vmatpush.msra.mxu0 %v304
    %497 = vmatpush.msra.mxu0 %v301
    %498 = vmatpush.msra.mxu0 %v298
    %499 = vmatpush.msra.mxu0 %v295
    %500 = vmatpush.msra.mxu0 %v292
    %501 = vmatpush.msra.mxu0 %v289
    %502 = vmatpush.msra.mxu0 %v286
    %503 = vmatpush.msra.mxu0 %v283
    %504 = vmatmul.f32.gmra.mxu0 %v447
    %v505 = vpop.f32.mrf.mxu0
    %v506 = vadd.f32 %v334, %v505
    %507 = vdwg.mxu0
    %s508 = scalar_lea.vmem [#allocation2], 24
    %v509 = vld [vmem:[%s508] sm:$0xff]
    %v510 = vld [vmem:[%s508 + $0x8] sm:$0xff]
    %v511 = vld [vmem:[%s508 + $0x10] sm:$0xff]
    %v512 = vadd.f32 %v509, %v466
    %v513 = vadd.f32 %v510, %v486
    %v514 = vxor.u32 %v512, 2147483648
    %v515 = vxor.u32 %v513, 2147483648
    %v516 = vmul.f32 %v514, 1.442695
    %v517 = vpow.pop %v516
    %v518 = vmul.f32 %v515, 1.442695
    %v519 = vpow.pop %v518
    %v520 = vadd.f32 %v517, 1.0
    %v521 = vadd.f32 %v519, 1.0
    %v522 = vrcp.pop %v520
    %v523 = vmul.f32 %v520, %v522
    %v524 = vsub.f32 1.0, %v523
    %v525 = vmul.f32 %v522, %v524
    %v526 = vadd.f32 %v522, %v525
    %vm527 = vweird.f32 %v520
    %vm528 = vweird.f32 %v522
    %vm529 = vmor %vm527, %vm528
    %v530 = vsel %vm529, %v522, %v526
    %v531 = vand.u32 2147483647, %v520
    %vm532 = vcmp.eq.f32.partialorder %v531, 8.507059e+37
    %v533 = vand.u32 %v520, 2147483648
    %v534 = vor.u32 1.1754944e-38, %v533
    %v535 = vsel %vm532, %v534, %v530
    %v536 = vmul.f32 1.0, %v535
    %v537 = vrcp.pop %v521
    %v538 = vmul.f32 %v521, %v537
    %v539 = vsub.f32 1.0, %v538
    %v540 = vmul.f32 %v537, %v539
    %v541 = vadd.f32 %v537, %v540
    %vm542 = vweird.f32 %v521
    %vm543 = vweird.f32 %v537
    %vm544 = vmor %vm542, %vm543
    %v545 = vsel %vm544, %v537, %v541
    %v546 = vand.u32 2147483647, %v521
    %vm547 = vcmp.eq.f32.partialorder %v546, 8.507059e+37
    %v548 = vand.u32 %v521, 2147483648
    %v549 = vor.u32 1.1754944e-38, %v548
    %v550 = vsel %vm547, %v549, %v545
    %v551 = vmul.f32 1.0, %v550
    %v552 = vmul.f32 %v536, %v506
    %v553 = vadd.f32 %v511, %v552
    %v554 = vtanh.pop %v553
    %v555 = vsub.f32 1.0, %v551
    %v556 = vmul.f32 %v555, %v554
    %v557 = vmul.f32 %v551, %v447
    %v558 = vadd.f32 %v556, %v557
    %559 = vmatpush.msra.mxu0 %v326
    %560 = vmatpush.msra.mxu0 %v323
    %561 = vmatpush.msra.mxu0 %v320
    %562 = vmatpush.msra.mxu0 %v317
    %563 = vmatpush.msra.mxu0 %v314
    %564 = vmatpush.msra.mxu0 %v311
    %565 = vmatpush.msra.mxu0 %v308
    %566 = vmatpush.msra.mxu0 %v305
    %567 = vmatpush.msra.mxu0 %v302
    %568 = vmatpush.msra.mxu0 %v299
    %569 = vmatpush.msra.mxu0 %v296
    %570 = vmatpush.msra.mxu0 %v293
    %571 = vmatpush.msra.mxu0 %v290
    %572 = vmatpush.msra.mxu0 %v287
    %573 = vmatpush.msra.mxu0 %v284
    %574 = vmatpush.msra.mxu0 %v281
    %575 = vmatmul.f32.gmra.mxu0 %v558
    %v576 = vpop.f32.mrf.mxu0
    %v577 = vadd.f32 %v332, %v576
    %578 = vdwg.mxu0
    %579 = vmatpush.msra.mxu0 %v327
    %580 = vmatpush.msra.mxu0 %v324
    %581 = vmatpush.msra.mxu0 %v321
    %582 = vmatpush.msra.mxu0 %v318
    %583 = vmatpush.msra.mxu0 %v315
    %584 = vmatpush.msra.mxu0 %v312
    %585 = vmatpush.msra.mxu0 %v309
    %586 = vmatpush.msra.mxu0 %v306
    %587 = vmatpush.msra.mxu0 %v303
    %588 = vmatpush.msra.mxu0 %v300
    %589 = vmatpush.msra.mxu0 %v297
    %590 = vmatpush.msra.mxu0 %v294
    %591 = vmatpush.msra.mxu0 %v291
    %592 = vmatpush.msra.mxu0 %v288
    %593 = vmatpush.msra.mxu0 %v285
    %594 = vmatpush.msra.mxu0 %v282
    %595 = vmatmul.f32.gmra.mxu0 %v558
    %v596 = vpop.f32.mrf.mxu0
    %v597 = vadd.f32 %v333, %v596
    %598 = vdwg.mxu0
    %599 = vmatpush.msra.mxu0 %v328
    %600 = vmatpush.msra.mxu0 %v325
    %601 = vmatpush.msra.mxu0 %v322
    %602 = vmatpush.msra.mxu0 %v319
    %603 = vmatpush.msra.mxu0 %v316
    %604 = vmatpush.msra.mxu0 %v313
    %605 = vmatpush.msra.mxu0 %v310
    %606 = vmatpush.msra.mxu0 %v307
    %607 = vmatpush.msra.mxu0 %v304
    %608 = vmatpush.msra.mxu0 %v301
    %609 = vmatpush.msra.mxu0 %v298
    %610 = vmatpush.msra.mxu0 %v295
    %611 = vmatpush.msra.mxu0 %v292
    %612 = vmatpush.msra.mxu0 %v289
    %613 = vmatpush.msra.mxu0 %v286
    %614 = vmatpush.msra.mxu0 %v283
    %615 = vmatmul.f32.gmra.mxu0 %v558
    %v616 = vpop.f32.mrf.mxu0
    %v617 = vadd.f32 %v334, %v616
    %618 = vdwg.mxu0
    %s619 = scalar_lea.vmem [#allocation2], 48
    %v620 = vld [vmem:[%s619] sm:$0xff]
    %v621 = vld [vmem:[%s619 + $0x8] sm:$0xff]
    %v622 = vld [vmem:[%s619 + $0x10] sm:$0xff]
    %v623 = vadd.f32 %v620, %v577
    %v624 = vadd.f32 %v621, %v597
    %v625 = vxor.u32 %v623, 2147483648
    %v626 = vxor.u32 %v624, 2147483648
    %v627 = vmul.f32 %v625, 1.442695
    %v628 = vpow.pop %v627
    %v629 = vmul.f32 %v626, 1.442695
    %v630 = vpow.pop %v629
    %v631 = vadd.f32 %v628, 1.0
    %v632 = vadd.f32 %v630, 1.0
    %v633 = vrcp.pop %v631
    %v634 = vmul.f32 %v631, %v633
    %v635 = vsub.f32 1.0, %v634
    %v636 = vmul.f32 %v633, %v635
    %v637 = vadd.f32 %v633, %v636
    %vm638 = vweird.f32 %v631
    %vm639 = vweird.f32 %v633
    %vm640 = vmor %vm638, %vm639
    %v641 = vsel %vm640, %v633, %v637
    %v642 = vand.u32 2147483647, %v631
    %vm643 = vcmp.eq.f32.partialorder %v642, 8.507059e+37
    %v644 = vand.u32 %v631, 2147483648
    %v645 = vor.u32 1.1754944e-38, %v644
    %v646 = vsel %vm643, %v645, %v641
    %v647 = vmul.f32 1.0, %v646
    %v648 = vrcp.pop %v632
    %v649 = vmul.f32 %v632, %v648
    %v650 = vsub.f32 1.0, %v649
    %v651 = vmul.f32 %v648, %v650
    %v652 = vadd.f32 %v648, %v651
    %vm653 = vweird.f32 %v632
    %vm654 = vweird.f32 %v648
    %vm655 = vmor %vm653, %vm654
    %v656 = vsel %vm655, %v648, %v652
    %v657 = vand.u32 2147483647, %v632
    %vm658 = vcmp.eq.f32.partialorder %v657, 8.507059e+37
    %v659 = vand.u32 %v632, 2147483648
    %v660 = vor.u32 1.1754944e-38, %v659
    %v661 = vsel %vm658, %v660, %v656
    %v662 = vmul.f32 1.0, %v661
    %v663 = vmul.f32 %v647, %v617
    %v664 = vadd.f32 %v622, %v663
    %v665 = vtanh.pop %v664
    %v666 = vsub.f32 1.0, %v662
    %v667 = vmul.f32 %v666, %v665
    %v668 = vmul.f32 %v662, %v558
    %v669 = vadd.f32 %v667, %v668
    %670 = vmatpush.msra.mxu0 %v326
    %671 = vmatpush.msra.mxu0 %v323
    %672 = vmatpush.msra.mxu0 %v320
    %673 = vmatpush.msra.mxu0 %v317
    %674 = vmatpush.msra.mxu0 %v314
    %675 = vmatpush.msra.mxu0 %v311
    %676 = vmatpush.msra.mxu0 %v308
    %677 = vmatpush.msra.mxu0 %v305
    %678 = vmatpush.msra.mxu0 %v302
    %679 = vmatpush.msra.mxu0 %v299
    %680 = vmatpush.msra.mxu0 %v296
    %681 = vmatpush.msra.mxu0 %v293
    %682 = vmatpush.msra.mxu0 %v290
    %683 = vmatpush.msra.mxu0 %v287
    %684 = vmatpush.msra.mxu0 %v284
    %685 = vmatpush.msra.mxu0 %v281
    %686 = vmatmul.f32.gmra.mxu0 %v669
    %v687 = vpop.f32.mrf.mxu0
    %v688 = vadd.f32 %v332, %v687
    %689 = vdwg.mxu0
    %690 = vmatpush.msra.mxu0 %v327
    %691 = vmatpush.msra.mxu0 %v324
    %692 = vmatpush.msra.mxu0 %v321
    %693 = vmatpush.msra.mxu0 %v318
    %694 = vmatpush.msra.mxu0 %v315
    %695 = vmatpush.msra.mxu0 %v312
    %696 = vmatpush.msra.mxu0 %v309
    %697 = vmatpush.msra.mxu0 %v306
    %698 = vmatpush.msra.mxu0 %v303
    %699 = vmatpush.msra.mxu0 %v300
    %700 = vmatpush.msra.mxu0 %v297
    %701 = vmatpush.msra.mxu0 %v294
    %702 = vmatpush.msra.mxu0 %v291
    %703 = vmatpush.msra.mxu0 %v288
    %704 = vmatpush.msra.mxu0 %v285
    %705 = vmatpush.msra.mxu0 %v282
    %706 = vmatmul.f32.gmra.mxu0 %v669
    %v707 = vpop.f32.mrf.mxu0
    %v708 = vadd.f32 %v333, %v707
    %709 = vdwg.mxu0
    %710 = vmatpush.msra.mxu0 %v328
    %711 = vmatpush.msra.mxu0 %v325
    %712 = vmatpush.msra.mxu0 %v322
    %713 = vmatpush.msra.mxu0 %v319
    %714 = vmatpush.msra.mxu0 %v316
    %715 = vmatpush.msra.mxu0 %v313
    %716 = vmatpush.msra.mxu0 %v310
    %717 = vmatpush.msra.mxu0 %v307
    %718 = vmatpush.msra.mxu0 %v304
    %719 = vmatpush.msra.mxu0 %v301
    %720 = vmatpush.msra.mxu0 %v298
    %721 = vmatpush.msra.mxu0 %v295
    %722 = vmatpush.msra.mxu0 %v292
    %723 = vmatpush.msra.mxu0 %v289
    %724 = vmatpush.msra.mxu0 %v286
    %725 = vmatpush.msra.mxu0 %v283
    %726 = vmatmul.f32.gmra.mxu0 %v669
    %v727 = vpop.f32.mrf.mxu0
    %v728 = vadd.f32 %v334, %v727
    %729 = vdwg.mxu0
    %s730 = scalar_lea.vmem [#allocation2], 72
    %v731 = vld [vmem:[%s730] sm:$0xff]
    %v732 = vld [vmem:[%s730 + $0x8] sm:$0xff]
    %v733 = vld [vmem:[%s730 + $0x10] sm:$0xff]
    %v734 = vadd.f32 %v731, %v688
    %v735 = vadd.f32 %v732, %v708
    %v736 = vxor.u32 %v734, 2147483648
    %v737 = vxor.u32 %v735, 2147483648
    %v738 = vmul.f32 %v736, 1.442695
    %v739 = vpow.pop %v738
    %v740 = vmul.f32 %v737, 1.442695
    %v741 = vpow.pop %v740
    %v742 = vadd.f32 %v739, 1.0
    %v743 = vadd.f32 %v741, 1.0
    %v744 = vrcp.pop %v742
    %v745 = vmul.f32 %v742, %v744
    %v746 = vsub.f32 1.0, %v745
    %v747 = vmul.f32 %v744, %v746
    %v748 = vadd.f32 %v744, %v747
    %vm749 = vweird.f32 %v742
    %vm750 = vweird.f32 %v744
    %vm751 = vmor %vm749, %vm750
    %v752 = vsel %vm751, %v744, %v748
    %v753 = vand.u32 2147483647, %v742
    %vm754 = vcmp.eq.f32.partialorder %v753, 8.507059e+37
    %v755 = vand.u32 %v742, 2147483648
    %v756 = vor.u32 1.1754944e-38, %v755
    %v757 = vsel %vm754, %v756, %v752
    %v758 = vmul.f32 1.0, %v757
    %v759 = vrcp.pop %v743
    %v760 = vmul.f32 %v743, %v759
    %v761 = vsub.f32 1.0, %v760
    %v762 = vmul.f32 %v759, %v761
    %v763 = vadd.f32 %v759, %v762
    %vm764 = vweird.f32 %v743
    %vm765 = vweird.f32 %v759
    %vm766 = vmor %vm764, %vm765
    %v767 = vsel %vm766, %v759, %v763
    %v768 = vand.u32 2147483647, %v743
    %vm769 = vcmp.eq.f32.partialorder %v768, 8.507059e+37
    %v770 = vand.u32 %v743, 2147483648
    %v771 = vor.u32 1.1754944e-38, %v770
    %v772 = vsel %vm769, %v771, %v767
    %v773 = vmul.f32 1.0, %v772
    %v774 = vmul.f32 %v758, %v728
    %v775 = vadd.f32 %v733, %v774
    %v776 = vtanh.pop %v775
    %v777 = vsub.f32 1.0, %v773
    %v778 = vmul.f32 %v777, %v776
    %v779 = vmul.f32 %v773, %v669
    %v780 = vadd.f32 %v778, %v779
    %781 = vmatpush.msra.mxu0 %v326
    %782 = vmatpush.msra.mxu0 %v323
    %783 = vmatpush.msra.mxu0 %v320
    %784 = vmatpush.msra.mxu0 %v317
    %785 = vmatpush.msra.mxu0 %v314
    %786 = vmatpush.msra.mxu0 %v311
    %787 = vmatpush.msra.mxu0 %v308
    %788 = vmatpush.msra.mxu0 %v305
    %789 = vmatpush.msra.mxu0 %v302
    %790 = vmatpush.msra.mxu0 %v299
    %791 = vmatpush.msra.mxu0 %v296
    %792 = vmatpush.msra.mxu0 %v293
    %793 = vmatpush.msra.mxu0 %v290
    %794 = vmatpush.msra.mxu0 %v287
    %795 = vmatpush.msra.mxu0 %v284
    %796 = vmatpush.msra.mxu0 %v281
    %797 = vmatmul.f32.gmra.mxu0 %v780
    %v798 = vpop.f32.mrf.mxu0
    %v799 = vadd.f32 %v332, %v798
    %800 = vdwg.mxu0
    %801 = vmatpush.msra.mxu0 %v327
    %802 = vmatpush.msra.mxu0 %v324
    %803 = vmatpush.msra.mxu0 %v321
    %804 = vmatpush.msra.mxu0 %v318
    %805 = vmatpush.msra.mxu0 %v315
    %806 = vmatpush.msra.mxu0 %v312
    %807 = vmatpush.msra.mxu0 %v309
    %808 = vmatpush.msra.mxu0 %v306
    %809 = vmatpush.msra.mxu0 %v303
    %810 = vmatpush.msra.mxu0 %v300
    %811 = vmatpush.msra.mxu0 %v297
    %812 = vmatpush.msra.mxu0 %v294
    %813 = vmatpush.msra.mxu0 %v291
    %814 = vmatpush.msra.mxu0 %v288
    %815 = vmatpush.msra.mxu0 %v285
    %816 = vmatpush.msra.mxu0 %v282
    %817 = vmatmul.f32.gmra.mxu0 %v780
    %v818 = vpop.f32.mrf.mxu0
    %v819 = vadd.f32 %v333, %v818
    %820 = vdwg.mxu0
    %821 = vmatpush.msra.mxu0 %v328
    %822 = vmatpush.msra.mxu0 %v325
    %823 = vmatpush.msra.mxu0 %v322
    %824 = vmatpush.msra.mxu0 %v319
    %825 = vmatpush.msra.mxu0 %v316
    %826 = vmatpush.msra.mxu0 %v313
    %827 = vmatpush.msra.mxu0 %v310
    %828 = vmatpush.msra.mxu0 %v307
    %829 = vmatpush.msra.mxu0 %v304
    %830 = vmatpush.msra.mxu0 %v301
    %831 = vmatpush.msra.mxu0 %v298
    %832 = vmatpush.msra.mxu0 %v295
    %833 = vmatpush.msra.mxu0 %v292
    %834 = vmatpush.msra.mxu0 %v289
    %835 = vmatpush.msra.mxu0 %v286
    %836 = vmatpush.msra.mxu0 %v283
    %837 = vmatmul.f32.gmra.mxu0 %v780
    %v838 = vpop.f32.mrf.mxu0
    %v839 = vadd.f32 %v334, %v838
    %840 = vdwg.mxu0
    %s841 = scalar_lea.vmem [#allocation2], 96
    %v842 = vld [vmem:[%s841] sm:$0xff]
    %v843 = vld [vmem:[%s841 + $0x8] sm:$0xff]
    %v844 = vld [vmem:[%s841 + $0x10] sm:$0xff]
    %v845 = vadd.f32 %v842, %v799
    %v846 = vadd.f32 %v843, %v819
    %v847 = vxor.u32 %v845, 2147483648
    %v848 = vxor.u32 %v846, 2147483648
    %v849 = vmul.f32 %v847, 1.442695
    %v850 = vpow.pop %v849
    %v851 = vmul.f32 %v848, 1.442695
    %v852 = vpow.pop %v851
    %v853 = vadd.f32 %v850, 1.0
    %v854 = vadd.f32 %v852, 1.0
    %v855 = vrcp.pop %v853
    %v856 = vmul.f32 %v853, %v855
    %v857 = vsub.f32 1.0, %v856
    %v858 = vmul.f32 %v855, %v857
    %v859 = vadd.f32 %v855, %v858
    %vm860 = vweird.f32 %v853
    %vm861 = vweird.f32 %v855
    %vm862 = vmor %vm860, %vm861
    %v863 = vsel %vm862, %v855, %v859
    %v864 = vand.u32 2147483647, %v853
    %vm865 = vcmp.eq.f32.partialorder %v864, 8.507059e+37
    %v866 = vand.u32 %v853, 2147483648
    %v867 = vor.u32 1.1754944e-38, %v866
    %v868 = vsel %vm865, %v867, %v863
    %v869 = vmul.f32 1.0, %v868
    %v870 = vrcp.pop %v854
    %v871 = vmul.f32 %v854, %v870
    %v872 = vsub.f32 1.0, %v871
    %v873 = vmul.f32 %v870, %v872
    %v874 = vadd.f32 %v870, %v873
    %vm875 = vweird.f32 %v854
    %vm876 = vweird.f32 %v870
    %vm877 = vmor %vm875, %vm876
    %v878 = vsel %vm877, %v870, %v874
    %v879 = vand.u32 2147483647, %v854
    %vm880 = vcmp.eq.f32.partialorder %v879, 8.507059e+37
    %v881 = vand.u32 %v854, 2147483648
    %v882 = vor.u32 1.1754944e-38, %v881
    %v883 = vsel %vm880, %v882, %v878
    %v884 = vmul.f32 1.0, %v883
    %v885 = vmul.f32 %v869, %v839
    %v886 = vadd.f32 %v844, %v885
    %v887 = vtanh.pop %v886
    %v888 = vsub.f32 1.0, %v884
    %v889 = vmul.f32 %v888, %v887
    %v890 = vmul.f32 %v884, %v780
    %v891 = vadd.f32 %v889, %v890
    %892 = vmatpush.msra.mxu0 %v326
    %893 = vmatpush.msra.mxu0 %v323
    %894 = vmatpush.msra.mxu0 %v320
    %895 = vmatpush.msra.mxu0 %v317
    %896 = vmatpush.msra.mxu0 %v314
    %897 = vmatpush.msra.mxu0 %v311
    %898 = vmatpush.msra.mxu0 %v308
    %899 = vmatpush.msra.mxu0 %v305
    %900 = vmatpush.msra.mxu0 %v302
    %901 = vmatpush.msra.mxu0 %v299
    %902 = vmatpush.msra.mxu0 %v296
    %903 = vmatpush.msra.mxu0 %v293
    %904 = vmatpush.msra.mxu0 %v290
    %905 = vmatpush.msra.mxu0 %v287
    %906 = vmatpush.msra.mxu0 %v284
    %907 = vmatpush.msra.mxu0 %v281
    %908 = vmatmul.f32.gmra.mxu0 %v891
    %v909 = vpop.f32.mrf.mxu0
    %v910 = vadd.f32 %v332, %v909
    %911 = vdwg.mxu0
    %912 = vmatpush.msra.mxu0 %v327
    %913 = vmatpush.msra.mxu0 %v324
    %914 = vmatpush.msra.mxu0 %v321
    %915 = vmatpush.msra.mxu0 %v318
    %916 = vmatpush.msra.mxu0 %v315
    %917 = vmatpush.msra.mxu0 %v312
    %918 = vmatpush.msra.mxu0 %v309
    %919 = vmatpush.msra.mxu0 %v306
    %920 = vmatpush.msra.mxu0 %v303
    %921 = vmatpush.msra.mxu0 %v300
    %922 = vmatpush.msra.mxu0 %v297
    %923 = vmatpush.msra.mxu0 %v294
    %924 = vmatpush.msra.mxu0 %v291
    %925 = vmatpush.msra.mxu0 %v288
    %926 = vmatpush.msra.mxu0 %v285
    %927 = vmatpush.msra.mxu0 %v282
    %928 = vmatmul.f32.gmra.mxu0 %v891
    %v929 = vpop.f32.mrf.mxu0
    %v930 = vadd.f32 %v333, %v929
    %931 = vdwg.mxu0
    %932 = vmatpush.msra.mxu0 %v328
    %933 = vmatpush.msra.mxu0 %v325
    %934 = vmatpush.msra.mxu0 %v322
    %935 = vmatpush.msra.mxu0 %v319
    %936 = vmatpush.msra.mxu0 %v316
    %937 = vmatpush.msra.mxu0 %v313
    %938 = vmatpush.msra.mxu0 %v310
    %939 = vmatpush.msra.mxu0 %v307
    %940 = vmatpush.msra.mxu0 %v304
    %941 = vmatpush.msra.mxu0 %v301
    %942 = vmatpush.msra.mxu0 %v298
    %943 = vmatpush.msra.mxu0 %v295
    %944 = vmatpush.msra.mxu0 %v292
    %945 = vmatpush.msra.mxu0 %v289
    %946 = vmatpush.msra.mxu0 %v286
    %947 = vmatpush.msra.mxu0 %v283
    %948 = vmatmul.f32.gmra.mxu0 %v891
    %v949 = vpop.f32.mrf.mxu0
    %v950 = vadd.f32 %v334, %v949
    %951 = vdwg.mxu0
    %s952 = scalar_lea.vmem [#allocation2], 120
    %v953 = vld [vmem:[%s952] sm:$0xff]
    %v954 = vld [vmem:[%s952 + $0x8] sm:$0xff]
    %v955 = vld [vmem:[%s952 + $0x10] sm:$0xff]
    %v956 = vadd.f32 %v953, %v910
    %v957 = vadd.f32 %v954, %v930
    %v958 = vxor.u32 %v956, 2147483648
    %v959 = vxor.u32 %v957, 2147483648
    %v960 = vmul.f32 %v958, 1.442695
    %v961 = vpow.pop %v960
    %v962 = vmul.f32 %v959, 1.442695
    %v963 = vpow.pop %v962
    %v964 = vadd.f32 %v961, 1.0
    %v965 = vadd.f32 %v963, 1.0
    %v966 = vrcp.pop %v964
    %v967 = vmul.f32 %v964, %v966
    %v968 = vsub.f32 1.0, %v967
    %v969 = vmul.f32 %v966, %v968
    %v970 = vadd.f32 %v966, %v969
    %vm971 = vweird.f32 %v964
    %vm972 = vweird.f32 %v966
    %vm973 = vmor %vm971, %vm972
    %v974 = vsel %vm973, %v966, %v970
    %v975 = vand.u32 2147483647, %v964
    %vm976 = vcmp.eq.f32.partialorder %v975, 8.507059e+37
    %v977 = vand.u32 %v964, 2147483648
    %v978 = vor.u32 1.1754944e-38, %v977
    %v979 = vsel %vm976, %v978, %v974
    %v980 = vmul.f32 1.0, %v979
    %v981 = vrcp.pop %v965
    %v982 = vmul.f32 %v965, %v981
    %v983 = vsub.f32 1.0, %v982
    %v984 = vmul.f32 %v981, %v983
    %v985 = vadd.f32 %v981, %v984
    %vm986 = vweird.f32 %v965
    %vm987 = vweird.f32 %v981
    %vm988 = vmor %vm986, %vm987
    %v989 = vsel %vm988, %v981, %v985
    %v990 = vand.u32 2147483647, %v965
    %vm991 = vcmp.eq.f32.partialorder %v990, 8.507059e+37
    %v992 = vand.u32 %v965, 2147483648
    %v993 = vor.u32 1.1754944e-38, %v992
    %v994 = vsel %vm991, %v993, %v989
    %v995 = vmul.f32 1.0, %v994
    %v996 = vmul.f32 %v980, %v950
    %v997 = vadd.f32 %v955, %v996
    %v998 = vtanh.pop %v997
    %v999 = vsub.f32 1.0, %v995
    %v1000 = vmul.f32 %v999, %v998
    %v1001 = vmul.f32 %v995, %v891
    %v1002 = vadd.f32 %v1000, %v1001
    %1003 = vmatpush.msra.mxu0 %v326
    %1004 = vmatpush.msra.mxu0 %v323
    %1005 = vmatpush.msra.mxu0 %v320
    %1006 = vmatpush.msra.mxu0 %v317
    %1007 = vmatpush.msra.mxu0 %v314
    %1008 = vmatpush.msra.mxu0 %v311
    %1009 = vmatpush.msra.mxu0 %v308
    %1010 = vmatpush.msra.mxu0 %v305
    %1011 = vmatpush.msra.mxu0 %v302
    %1012 = vmatpush.msra.mxu0 %v299
    %1013 = vmatpush.msra.mxu0 %v296
    %1014 = vmatpush.msra.mxu0 %v293
    %1015 = vmatpush.msra.mxu0 %v290
    %1016 = vmatpush.msra.mxu0 %v287
    %1017 = vmatpush.msra.mxu0 %v284
    %1018 = vmatpush.msra.mxu0 %v281
    %1019 = vmatmul.f32.gmra.mxu0 %v1002
    %v1020 = vpop.f32.mrf.mxu0
    %v1021 = vadd.f32 %v332, %v1020
    %1022 = vdwg.mxu0
    %1023 = vmatpush.msra.mxu0 %v327
    %1024 = vmatpush.msra.mxu0 %v324
    %1025 = vmatpush.msra.mxu0 %v321
    %1026 = vmatpush.msra.mxu0 %v318
    %1027 = vmatpush.msra.mxu0 %v315
    %1028 = vmatpush.msra.mxu0 %v312
    %1029 = vmatpush.msra.mxu0 %v309
    %1030 = vmatpush.msra.mxu0 %v306
    %1031 = vmatpush.msra.mxu0 %v303
    %1032 = vmatpush.msra.mxu0 %v300
    %1033 = vmatpush.msra.mxu0 %v297
    %1034 = vmatpush.msra.mxu0 %v294
    %1035 = vmatpush.msra.mxu0 %v291
    %1036 = vmatpush.msra.mxu0 %v288
    %1037 = vmatpush.msra.mxu0 %v285
    %1038 = vmatpush.msra.mxu0 %v282
    %1039 = vmatmul.f32.gmra.mxu0 %v1002
    %v1040 = vpop.f32.mrf.mxu0
    %v1041 = vadd.f32 %v333, %v1040
    %1042 = vdwg.mxu0
    %1043 = vmatpush.msra.mxu0 %v328
    %1044 = vmatpush.msra.mxu0 %v325
    %1045 = vmatpush.msra.mxu0 %v322
    %1046 = vmatpush.msra.mxu0 %v319
    %1047 = vmatpush.msra.mxu0 %v316
    %1048 = vmatpush.msra.mxu0 %v313
    %1049 = vmatpush.msra.mxu0 %v310
    %1050 = vmatpush.msra.mxu0 %v307
    %1051 = vmatpush.msra.mxu0 %v304
    %1052 = vmatpush.msra.mxu0 %v301
    %1053 = vmatpush.msra.mxu0 %v298
    %1054 = vmatpush.msra.mxu0 %v295
    %1055 = vmatpush.msra.mxu0 %v292
    %1056 = vmatpush.msra.mxu0 %v289
    %1057 = vmatpush.msra.mxu0 %v286
    %1058 = vmatpush.msra.mxu0 %v283
    %1059 = vmatmul.f32.gmra.mxu0 %v1002
    %v1060 = vpop.f32.mrf.mxu0
    %v1061 = vadd.f32 %v334, %v1060
    %1062 = vdwg.mxu0
    %s1063 = scalar_lea.vmem [#allocation2], 144
    %v1064 = vld [vmem:[%s1063] sm:$0xff]
    %v1065 = vld [vmem:[%s1063 + $0x8] sm:$0xff]
    %v1066 = vld [vmem:[%s1063 + $0x10] sm:$0xff]
    %v1067 = vadd.f32 %v1064, %v1021
    %v1068 = vadd.f32 %v1065, %v1041
    %v1069 = vxor.u32 %v1067, 2147483648
    %v1070 = vxor.u32 %v1068, 2147483648
    %v1071 = vmul.f32 %v1069, 1.442695
    %v1072 = vpow.pop %v1071
    %v1073 = vmul.f32 %v1070, 1.442695
    %v1074 = vpow.pop %v1073
    %v1075 = vadd.f32 %v1072, 1.0
    %v1076 = vadd.f32 %v1074, 1.0
    %v1077 = vrcp.pop %v1075
    %v1078 = vmul.f32 %v1075, %v1077
    %v1079 = vsub.f32 1.0, %v1078
    %v1080 = vmul.f32 %v1077, %v1079
    %v1081 = vadd.f32 %v1077, %v1080
    %vm1082 = vweird.f32 %v1075
    %vm1083 = vweird.f32 %v1077
    %vm1084 = vmor %vm1082, %vm1083
    %v1085 = vsel %vm1084, %v1077, %v1081
    %v1086 = vand.u32 2147483647, %v1075
    %vm1087 = vcmp.eq.f32.partialorder %v1086, 8.507059e+37
    %v1088 = vand.u32 %v1075, 2147483648
    %v1089 = vor.u32 1.1754944e-38, %v1088
    %v1090 = vsel %vm1087, %v1089, %v1085
    %v1091 = vmul.f32 1.0, %v1090
    %v1092 = vrcp.pop %v1076
    %v1093 = vmul.f32 %v1076, %v1092
    %v1094 = vsub.f32 1.0, %v1093
    %v1095 = vmul.f32 %v1092, %v1094
    %v1096 = vadd.f32 %v1092, %v1095
    %vm1097 = vweird.f32 %v1076
    %vm1098 = vweird.f32 %v1092
    %vm1099 = vmor %vm1097, %vm1098
    %v1100 = vsel %vm1099, %v1092, %v1096
    %v1101 = vand.u32 2147483647, %v1076
    %vm1102 = vcmp.eq.f32.partialorder %v1101, 8.507059e+37
    %v1103 = vand.u32 %v1076, 2147483648
    %v1104 = vor.u32 1.1754944e-38, %v1103
    %v1105 = vsel %vm1102, %v1104, %v1100
    %v1106 = vmul.f32 1.0, %v1105
    %v1107 = vmul.f32 %v1091, %v1061
    %v1108 = vadd.f32 %v1066, %v1107
    %v1109 = vtanh.pop %v1108
    %v1110 = vsub.f32 1.0, %v1106
    %v1111 = vmul.f32 %v1110, %v1109
    %v1112 = vmul.f32 %v1106, %v1002
    %v1113 = vadd.f32 %v1111, %v1112
    %1114 = vmatpush.msra.mxu0 %v326
    %1115 = vmatpush.msra.mxu0 %v323
    %1116 = vmatpush.msra.mxu0 %v320
    %1117 = vmatpush.msra.mxu0 %v317
    %1118 = vmatpush.msra.mxu0 %v314
    %1119 = vmatpush.msra.mxu0 %v311
    %1120 = vmatpush.msra.mxu0 %v308
    %1121 = vmatpush.msra.mxu0 %v305
    %1122 = vmatpush.msra.mxu0 %v302
    %1123 = vmatpush.msra.mxu0 %v299
    %1124 = vmatpush.msra.mxu0 %v296
    %1125 = vmatpush.msra.mxu0 %v293
    %1126 = vmatpush.msra.mxu0 %v290
    %1127 = vmatpush.msra.mxu0 %v287
    %1128 = vmatpush.msra.mxu0 %v284
    %1129 = vmatpush.msra.mxu0 %v281
    %1130 = vmatmul.f32.gmra.mxu0 %v1113
    %v1131 = vpop.f32.mrf.mxu0
    %v1132 = vadd.f32 %v332, %v1131
    %1133 = vdwg.mxu0
    %1134 = vmatpush.msra.mxu0 %v327
    %1135 = vmatpush.msra.mxu0 %v324
    %1136 = vmatpush.msra.mxu0 %v321
    %1137 = vmatpush.msra.mxu0 %v318
    %1138 = vmatpush.msra.mxu0 %v315
    %1139 = vmatpush.msra.mxu0 %v312
    %1140 = vmatpush.msra.mxu0 %v309
    %1141 = vmatpush.msra.mxu0 %v306
    %1142 = vmatpush.msra.mxu0 %v303
    %1143 = vmatpush.msra.mxu0 %v300
    %1144 = vmatpush.msra.mxu0 %v297
    %1145 = vmatpush.msra.mxu0 %v294
    %1146 = vmatpush.msra.mxu0 %v291
    %1147 = vmatpush.msra.mxu0 %v288
    %1148 = vmatpush.msra.mxu0 %v285
    %1149 = vmatpush.msra.mxu0 %v282
    %1150 = vmatmul.f32.gmra.mxu0 %v1113
    %v1151 = vpop.f32.mrf.mxu0
    %v1152 = vadd.f32 %v333, %v1151
    %1153 = vdwg.mxu0
    %1154 = vmatpush.msra.mxu0 %v328
    %1155 = vmatpush.msra.mxu0 %v325
    %1156 = vmatpush.msra.mxu0 %v322
    %1157 = vmatpush.msra.mxu0 %v319
    %1158 = vmatpush.msra.mxu0 %v316
    %1159 = vmatpush.msra.mxu0 %v313
    %1160 = vmatpush.msra.mxu0 %v310
    %1161 = vmatpush.msra.mxu0 %v307
    %1162 = vmatpush.msra.mxu0 %v304
    %1163 = vmatpush.msra.mxu0 %v301
    %1164 = vmatpush.msra.mxu0 %v298
    %1165 = vmatpush.msra.mxu0 %v295
    %1166 = vmatpush.msra.mxu0 %v292
    %1167 = vmatpush.msra.mxu0 %v289
    %1168 = vmatpush.msra.mxu0 %v286
    %1169 = vmatpush.msra.mxu0 %v283
    %1170 = vmatmul.f32.gmra.mxu0 %v1113
    %v1171 = vpop.f32.mrf.mxu0
    %v1172 = vadd.f32 %v334, %v1171
    %1173 = vdwg.mxu0
    %s1174 = scalar_lea.vmem [#allocation2], 168
    %v1175 = vld [vmem:[%s1174] sm:$0xff]
    %v1176 = vld [vmem:[%s1174 + $0x8] sm:$0xff]
    %v1177 = vld [vmem:[%s1174 + $0x10] sm:$0xff]
    %v1178 = vadd.f32 %v1175, %v1132
    %v1179 = vadd.f32 %v1176, %v1152
    %v1180 = vxor.u32 %v1178, 2147483648
    %v1181 = vxor.u32 %v1179, 2147483648
    %v1182 = vmul.f32 %v1180, 1.442695
    %v1183 = vpow.pop %v1182
    %v1184 = vmul.f32 %v1181, 1.442695
    %v1185 = vpow.pop %v1184
    %v1186 = vadd.f32 %v1183, 1.0
    %v1187 = vadd.f32 %v1185, 1.0
    %v1188 = vrcp.pop %v1186
    %v1189 = vmul.f32 %v1186, %v1188
    %v1190 = vsub.f32 1.0, %v1189
    %v1191 = vmul.f32 %v1188, %v1190
    %v1192 = vadd.f32 %v1188, %v1191
    %vm1193 = vweird.f32 %v1186
    %vm1194 = vweird.f32 %v1188
    %vm1195 = vmor %vm1193, %vm1194
    %v1196 = vsel %vm1195, %v1188, %v1192
    %v1197 = vand.u32 2147483647, %v1186
    %vm1198 = vcmp.eq.f32.partialorder %v1197, 8.507059e+37
    %v1199 = vand.u32 %v1186, 2147483648
    %v1200 = vor.u32 1.1754944e-38, %v1199
    %v1201 = vsel %vm1198, %v1200, %v1196
    %v1202 = vmul.f32 1.0, %v1201
    %v1203 = vrcp.pop %v1187
    %v1204 = vmul.f32 %v1187, %v1203
    %v1205 = vsub.f32 1.0, %v1204
    %v1206 = vmul.f32 %v1203, %v1205
    %v1207 = vadd.f32 %v1203, %v1206
    %vm1208 = vweird.f32 %v1187
    %vm1209 = vweird.f32 %v1203
    %vm1210 = vmor %vm1208, %vm1209
    %v1211 = vsel %vm1210, %v1203, %v1207
    %v1212 = vand.u32 2147483647, %v1187
    %vm1213 = vcmp.eq.f32.partialorder %v1212, 8.507059e+37
    %v1214 = vand.u32 %v1187, 2147483648
    %v1215 = vor.u32 1.1754944e-38, %v1214
    %v1216 = vsel %vm1213, %v1215, %v1211
    %v1217 = vmul.f32 1.0, %v1216
    %v1218 = vmul.f32 %v1202, %v1172
    %v1219 = vadd.f32 %v1177, %v1218
    %v1220 = vtanh.pop %v1219
    %v1221 = vsub.f32 1.0, %v1217
    %v1222 = vmul.f32 %v1221, %v1220
    %v1223 = vmul.f32 %v1217, %v1113
    %v1224 = vadd.f32 %v1222, %v1223
    %1225 = vst [vmem:[#allocation11] sm:$0xff] %v1224
    // Predicated region
    $region42: #{tpu_custom_call.1} parent=1 // pred_check
      _
    $region43: #{tpu_custom_call.1} parent=1 // pred_check_branch
      %1227 = sbr.rel (0) target = $region45
    $region44: #{tpu_custom_call.1} parent=1 // pred_region
      %1229 = vsyncadd [#allocation5], 0
      %s1231 = sshll.u32 [#allocation11], 4
      %s1232 = int_to_ptr.vmem [resolvable:$true] %s1231
      %s1233 = sshll.u32 %s5, 4
      %s1234 = int_to_ptr.hbm [resolvable:$true] %s1233
      %1236 = dma.vmem_to_hbm [thread:$0]  %s1232, 128, %s1234, [#allocation5]
    $region45: #{tpu_custom_call.1} parent=1 // pred_fallthru
      _
    // Predicated region
    $region46: #{tpu_custom_call.1} parent=1 // pred_check
      _
    $region47: #{tpu_custom_call.1} parent=1 // pred_check_branch
      %1238 = sbr.rel (0) target = $region49
    $region48: #{tpu_custom_call.1} parent=1 // pred_region
      %1240 = dma.done [#allocation5], 128
    $region49: #{tpu_custom_call.1} parent=1 // pred_fallthru
      _
    %1241 = vsyncpa [#allocation4], 1
    %1242 = vsyncpa [#allocation7], 1
    %1243 = vsyncpa [#allocation10], 1
    %1244 = vsyncpa [#allocation5], 1

</llo_original>
